<compile_context>
chip_gen: v5e
topology: v5e:2x2
jax: 0.10.0
libtpu: 0.0.40
codegen_flags: <defaults>
</compile_context>

<pallas_src>
import string

import jax
import jax.numpy as jnp
from jax.experimental import pallas as pl
from jax.experimental.pallas import tpu as pltpu

all_letters = string.ascii_letters + " .,;'"
n_letters = len(all_letters)  # 57


def lstm_classifier_kernel(
    x_ref,        # (seq, in)
    wih0_ref,     # (in, 4H)
    whhbd_ref,    # (2H, 8H)  block-diag [whh0 0; 0 whh1]
    b0_ref,       # (1, 4H)
    wih1_ref,     # (H, 4H)
    b1_ref,       # (1, 4H)
    h0_ref,       # (2, H)
    c0_ref,       # (2, H)
    fcw_ref,      # (H, OUT_PAD)
    fcb_ref,      # (1, OUT_PAD)
    logits_ref,   # (1, OUT_PAD)
    hn_ref,       # (2, H)
    cn_ref,       # (2, H)
):
    seq = x_ref.shape[0]
    H = c0_ref.shape[1]
    G = 4 * H

    # Hoist all weights / biases into values once.
    wih0 = wih0_ref[...]
    whh_bd = whhbd_ref[...]
    b0 = b0_ref[...]
    wih1 = wih1_ref[...]
    b1 = b1_ref[...]
    fcw = fcw_ref[...]
    fcb = fcb_ref[...]

    # Layer-0 input projection for the whole sequence in one MXU pass
    # (seq, in) x (in, 4H), bias folded in.
    x_proj = jnp.dot(x_ref[...], wih0, preferred_element_type=jnp.float32) + b0

    def gates_to_hc(gates, c):
        # Two full-vreg EUP passes over the (1, 4H=128) gate vector,
        # then static lane slices (i, f, g, o order like PyTorch).
        sig = jax.nn.sigmoid(gates)
        th = jnp.tanh(gates)
        i = sig[:, 0:H]
        f = sig[:, H:2 * H]
        g = th[:, 2 * H:3 * H]
        o = sig[:, 3 * H:4 * H]
        c_new = f * c + i * g
        h_new = o * jnp.tanh(c_new)
        return h_new, c_new

    h0 = h0_ref[0:1, :]
    h1 = h0_ref[1:2, :]
    c0 = c0_ref[0:1, :]
    c1 = c0_ref[1:2, :]

    # Fully unrolled recurrence (seq is a small static constant); all slices static.
    for t in range(seq):
        # Fused recurrent contribution for both layers: (1, 2H) x (2H, 8H).
        h_cat = jnp.concatenate([h0, h1], axis=1)
        rec = jnp.dot(h_cat, whh_bd, preferred_element_type=jnp.float32)  # (1, 8H)

        # Layer 0: input projection was precomputed.
        gates0 = x_proj[t:t + 1, :] + rec[:, 0:G]
        h0, c0 = gates_to_hc(gates0, c0)

        # Inter-layer dropout -> identity (eval mode).
        # Layer 1: one matmul on the critical path.
        gates1 = (
            jnp.dot(h0, wih1, preferred_element_type=jnp.float32)
            + b1
            + rec[:, G:2 * G]
        )
        h1, c1 = gates_to_hc(gates1, c1)

    # self.dropout -> identity (eval mode); fc on last-timestep output of layer 1.
    # fc weights are lane-padded to OUT_PAD so the store is a full-lane vst.
    logits_ref[...] = jnp.dot(h1, fcw, preferred_element_type=jnp.float32) + fcb
    hn_ref[0:1, :] = h0
    hn_ref[1:2, :] = h1
    cn_ref[0:1, :] = c0
    cn_ref[1:2, :] = c1


def lstm_classifier_forward(x, params, h0, c0):
    """x: (seq, n_letters); params: dict of pre-transposed weights; h0/c0: (2, H)."""
    H = params["whh0"].shape[0]
    out_size = params["fcw"].shape[1]
    OUT_PAD = 128  # lane-dense fc head; real logits are the first out_size lanes

    # Block-diagonal recurrent weight: [whh0 0; 0 whh1], shape (2H, 8H).
    whh_bd = jnp.zeros((2 * H, 8 * H), jnp.float32)
    whh_bd = whh_bd.at[:H, :4 * H].set(params["whh0"])
    whh_bd = whh_bd.at[H:, 4 * H:].set(params["whh1"])

    # Pad fc head to 128 output lanes.
    fcw_pad = jnp.zeros((H, OUT_PAD), jnp.float32).at[:, :out_size].set(params["fcw"])
    fcb_pad = jnp.zeros((1, OUT_PAD), jnp.float32).at[:, :out_size].set(params["fcb"])

    vmem = pl.BlockSpec(memory_space=pltpu.MemorySpace.VMEM)
    inputs = (
        x,
        params["wih0"], whh_bd, params["b0"],
        params["wih1"], params["b1"],
        h0, c0,
        fcw_pad, fcb_pad,
    )
    out_shapes = (
        jax.ShapeDtypeStruct((1, OUT_PAD), jnp.float32),
        jax.ShapeDtypeStruct((2, H), jnp.float32),
        jax.ShapeDtypeStruct((2, H), jnp.float32),
    )
    logits_pad, hn, cn = pl.pallas_call(
        lstm_classifier_kernel,
        out_shape=out_shapes,
        in_specs=[vmem] * len(inputs),
        out_specs=(vmem, vmem, vmem),
    )(*inputs)
    return logits_pad[:, :out_size], (hn, cn)


def init_params(key, input_size, hidden_size, output_size):
    """Deterministic init matching PyTorch parameter shapes (pre-transposed)."""
    H = hidden_size
    k = 1.0 / jnp.sqrt(jnp.float32(H))
    keys = jax.random.split(key, 10)

    def u(kk, shape):
        return jax.random.uniform(kk, shape, jnp.float32, -k, k)

    # layer 0
    wih0 = u(keys[0], (4 * H, input_size)).T      # -> (in, 4H)
    whh0 = u(keys[1], (4 * H, H)).T               # -> (H, 4H)
    b0 = (u(keys[2], (4 * H,)) + u(keys[3], (4 * H,))).reshape(1, 4 * H)
    # layer 1
    wih1 = u(keys[4], (4 * H, H)).T
    whh1 = u(keys[5], (4 * H, H)).T
    b1 = (u(keys[6], (4 * H,)) + u(keys[7], (4 * H,))).reshape(1, 4 * H)
    # fc
    kf = 1.0 / jnp.sqrt(jnp.float32(H))
    fcw = jax.random.uniform(keys[8], (output_size, H), jnp.float32, -kf, kf).T
    fcb = jax.random.uniform(keys[9], (output_size,), jnp.float32, -kf, kf).reshape(1, -1)

    return dict(wih0=wih0, whh0=whh0, b0=b0,
                wih1=wih1, whh1=whh1, b1=b1,
                fcw=fcw, fcb=fcb)


def reference_forward(x, params, h0, c0):
    """Pure-JAX reference mirroring torch.nn.LSTM (2 layers) + Linear, eval mode."""
    H = params["whh0"].shape[0]

    def cell(x_t, h, c, wih, whh, b):
        g = x_t @ wih + h @ whh + b
        i = jax.nn.sigmoid(g[:, 0:H])
        f = jax.nn.sigmoid(g[:, H:2 * H])
        gg = jnp.tanh(g[:, 2 * H:3 * H])
        o = jax.nn.sigmoid(g[:, 3 * H:4 * H])
        c_new = f * c + i * gg
        return o * jnp.tanh(c_new), c_new

    h_l0, h_l1 = h0[0:1], h0[1:2]
    c_l0, c_l1 = c0[0:1], c0[1:2]
    for t in range(x.shape[0]):
        x_t = x[t:t + 1]
        h_l0, c_l0 = cell(x_t, h_l0, c_l0, params["wih0"], params["whh0"], params["b0"])
        h_l1, c_l1 = cell(h_l0, h_l1, c_l1, params["wih1"], params["whh1"], params["b1"])
    logits = h_l1 @ params["fcw"] + params["fcb"]
    return logits, (jnp.concatenate([h_l0, h_l1], 0), jnp.concatenate([c_l0, c_l1], 0))


if __name__ == "__main__":
    input_size = n_letters      # 57
    hidden_size = 32
    output_size = 18
    seq_len = 8

    key = jax.random.PRNGKey(0)
    k_param, k_x = jax.random.split(key)
    params = init_params(k_param, input_size, hidden_size, output_size)

    # input.view(1, -1, n_letters) with batch=1  ->  (seq, n_letters) here
    x = jax.random.normal(k_x, (seq_len, input_size), jnp.float32)
    # initHidden(): zeros (2, 1, H) -> (2, H)
    h0 = jnp.zeros((2, hidden_size), jnp.float32)
    c0 = jnp.zeros((2, hidden_size), jnp.float32)

    logits, (hn, cn) = lstm_classifier_forward(x, params, h0, c0)
    jax.block_until_ready((logits, hn, cn))

    ref_logits, (ref_hn, ref_cn) = reference_forward(x, params, h0, c0)
    assert jnp.allclose(logits, ref_logits, atol=2e-2, rtol=2e-2)
    assert jnp.allclose(hn, ref_hn, atol=2e-2, rtol=2e-2)
    assert jnp.allclose(cn, ref_cn, atol=2e-2, rtol=2e-2)

    print("KERNEL_OK")
</pallas_src>

<mosaic_0001>
module attributes {stable_mosaic.version = 11 : i64} {
  func.func @lstm_classifier_kernel(%arg0: memref<8x57xf32, #tpu.memory_space<vmem>>, %arg1: memref<57x128xf32, #tpu.memory_space<vmem>>, %arg2: memref<64x256xf32, #tpu.memory_space<vmem>>, %arg3: memref<1x128xf32, #tpu.memory_space<vmem>>, %arg4: memref<32x128xf32, #tpu.memory_space<vmem>>, %arg5: memref<1x128xf32, #tpu.memory_space<vmem>>, %arg6: memref<2x32xf32, #tpu.memory_space<vmem>>, %arg7: memref<2x32xf32, #tpu.memory_space<vmem>>, %arg8: memref<32x128xf32, #tpu.memory_space<vmem>>, %arg9: memref<1x128xf32, #tpu.memory_space<vmem>>, %arg10: memref<1x128xf32, #tpu.memory_space<vmem>>, %arg11: memref<2x32xf32, #tpu.memory_space<vmem>>, %arg12: memref<2x32xf32, #tpu.memory_space<vmem>>) attributes {dimension_semantics = [], scalar_prefetch = 0 : i64, scratch_operands = 0 : i64, tpu.core_type = #tpu.core_type<tc>} {
    %c0 = arith.constant 0 : index
    %c0_0 = arith.constant 0 : index
    %0 = vector.load %arg1[%c0, %c0_0] : memref<57x128xf32, #tpu.memory_space<vmem>>, vector<57x128xf32>
    %c0_1 = arith.constant 0 : index
    %c0_2 = arith.constant 0 : index
    %1 = vector.load %arg2[%c0_1, %c0_2] : memref<64x256xf32, #tpu.memory_space<vmem>>, vector<64x256xf32>
    %c0_3 = arith.constant 0 : index
    %c0_4 = arith.constant 0 : index
    %2 = vector.load %arg3[%c0_3, %c0_4] : memref<1x128xf32, #tpu.memory_space<vmem>>, vector<1x128xf32>
    %c0_5 = arith.constant 0 : index
    %c0_6 = arith.constant 0 : index
    %3 = vector.load %arg4[%c0_5, %c0_6] : memref<32x128xf32, #tpu.memory_space<vmem>>, vector<32x128xf32>
    %c0_7 = arith.constant 0 : index
    %c0_8 = arith.constant 0 : index
    %4 = vector.load %arg5[%c0_7, %c0_8] : memref<1x128xf32, #tpu.memory_space<vmem>>, vector<1x128xf32>
    %c0_9 = arith.constant 0 : index
    %c0_10 = arith.constant 0 : index
    %5 = vector.load %arg8[%c0_9, %c0_10] : memref<32x128xf32, #tpu.memory_space<vmem>>, vector<32x128xf32>
    %c0_11 = arith.constant 0 : index
    %c0_12 = arith.constant 0 : index
    %6 = vector.load %arg9[%c0_11, %c0_12] : memref<1x128xf32, #tpu.memory_space<vmem>>, vector<1x128xf32>
    %c0_13 = arith.constant 0 : index
    %c0_14 = arith.constant 0 : index
    %7 = vector.load %arg0[%c0_13, %c0_14] : memref<8x57xf32, #tpu.memory_space<vmem>>, vector<8x57xf32>
    %cst = arith.constant dense<0.000000e+00> : vector<8x128xf32>
    %8 = tpu.matmul %7, %0, %cst {dimension_numbers = #tpu.dot_dimension_numbers<[1], [0], [0], [1], [0, 0, 1, 1], [], []>} : vector<8x57xf32>, vector<57x128xf32>, vector<8x128xf32> -> vector<8x128xf32>
    %9 = vector.broadcast %2 : vector<1x128xf32> to vector<8x128xf32>
    %10 = arith.addf %8, %9 : vector<8x128xf32>
    %c0_15 = arith.constant 0 : index
    %c0_16 = arith.constant 0 : index
    %11 = vector.load %arg6[%c0_15, %c0_16] : memref<2x32xf32, #tpu.memory_space<vmem>>, vector<1x32xf32>
    %c1 = arith.constant 1 : index
    %c0_17 = arith.constant 0 : index
    %12 = vector.load %arg6[%c1, %c0_17] : memref<2x32xf32, #tpu.memory_space<vmem>>, vector<1x32xf32>
    %c0_18 = arith.constant 0 : index
    %c0_19 = arith.constant 0 : index
    %13 = vector.load %arg7[%c0_18, %c0_19] : memref<2x32xf32, #tpu.memory_space<vmem>>, vector<1x32xf32>
    %c1_20 = arith.constant 1 : index
    %c0_21 = arith.constant 0 : index
    %14 = vector.load %arg7[%c1_20, %c0_21] : memref<2x32xf32, #tpu.memory_space<vmem>>, vector<1x32xf32>
    %15 = tpu.concatenate %11, %12 in 1 : vector<1x32xf32>, vector<1x32xf32> -> vector<1x64xf32>
    %cst_22 = arith.constant dense<0.000000e+00> : vector<1x256xf32>
    %16 = tpu.matmul %15, %1, %cst_22 {dimension_numbers = #tpu.dot_dimension_numbers<[1], [0], [0], [1], [0, 0, 1, 1], [], []>} : vector<1x64xf32>, vector<64x256xf32>, vector<1x256xf32> -> vector<1x256xf32>
    %17 = vector.extract_strided_slice %10 {offsets = [0, 0], sizes = [1, 128], strides = [1, 1]} : vector<8x128xf32> to vector<1x128xf32>
    %18 = vector.extract_strided_slice %16 {offsets = [0, 0], sizes = [1, 128], strides = [1, 1]} : vector<1x256xf32> to vector<1x128xf32>
    %19 = arith.addf %17, %18 : vector<1x128xf32>
    %20 = arith.negf %19 : vector<1x128xf32>
    %21 = math.exp %20 : vector<1x128xf32>
    %cst_23 = arith.constant 1.000000e+00 : f32
    %22 = vector.broadcast %cst_23 : f32 to vector<1x128xf32>
    %23 = arith.addf %22, %21 : vector<1x128xf32>
    %24 = arith.divf %22, %23 : vector<1x128xf32>
    %25 = math.tanh %19 : vector<1x128xf32>
    %26 = vector.extract_strided_slice %24 {offsets = [0, 0], sizes = [1, 32], strides = [1, 1]} : vector<1x128xf32> to vector<1x32xf32>
    %27 = vector.extract_strided_slice %24 {offsets = [0, 32], sizes = [1, 32], strides = [1, 1]} : vector<1x128xf32> to vector<1x32xf32>
    %28 = vector.extract_strided_slice %25 {offsets = [0, 64], sizes = [1, 32], strides = [1, 1]} : vector<1x128xf32> to vector<1x32xf32>
    %29 = vector.extract_strided_slice %24 {offsets = [0, 96], sizes = [1, 32], strides = [1, 1]} : vector<1x128xf32> to vector<1x32xf32>
    %30 = arith.mulf %27, %13 : vector<1x32xf32>
    %31 = arith.mulf %26, %28 : vector<1x32xf32>
    %32 = arith.addf %30, %31 : vector<1x32xf32>
    %33 = math.tanh %32 : vector<1x32xf32>
    %34 = arith.mulf %29, %33 : vector<1x32xf32>
    %cst_24 = arith.constant dense<0.000000e+00> : vector<1x128xf32>
    %35 = tpu.matmul %34, %3, %cst_24 {dimension_numbers = #tpu.dot_dimension_numbers<[1], [0], [0], [1], [0, 0, 1, 1], [], []>} : vector<1x32xf32>, vector<32x128xf32>, vector<1x128xf32> -> vector<1x128xf32>
    %36 = arith.addf %35, %4 : vector<1x128xf32>
    %37 = vector.extract_strided_slice %16 {offsets = [0, 128], sizes = [1, 128], strides = [1, 1]} : vector<1x256xf32> to vector<1x128xf32>
    %38 = arith.addf %36, %37 : vector<1x128xf32>
    %39 = arith.negf %38 : vector<1x128xf32>
    %40 = math.exp %39 : vector<1x128xf32>
    %cst_25 = arith.constant 1.000000e+00 : f32
    %41 = vector.broadcast %cst_25 : f32 to vector<1x128xf32>
    %42 = arith.addf %41, %40 : vector<1x128xf32>
    %43 = arith.divf %41, %42 : vector<1x128xf32>
    %44 = math.tanh %38 : vector<1x128xf32>
    %45 = vector.extract_strided_slice %43 {offsets = [0, 0], sizes = [1, 32], strides = [1, 1]} : vector<1x128xf32> to vector<1x32xf32>
    %46 = vector.extract_strided_slice %43 {offsets = [0, 32], sizes = [1, 32], strides = [1, 1]} : vector<1x128xf32> to vector<1x32xf32>
    %47 = vector.extract_strided_slice %44 {offsets = [0, 64], sizes = [1, 32], strides = [1, 1]} : vector<1x128xf32> to vector<1x32xf32>
    %48 = vector.extract_strided_slice %43 {offsets = [0, 96], sizes = [1, 32], strides = [1, 1]} : vector<1x128xf32> to vector<1x32xf32>
    %49 = arith.mulf %46, %14 : vector<1x32xf32>
    %50 = arith.mulf %45, %47 : vector<1x32xf32>
    %51 = arith.addf %49, %50 : vector<1x32xf32>
    %52 = math.tanh %51 : vector<1x32xf32>
    %53 = arith.mulf %48, %52 : vector<1x32xf32>
    %54 = tpu.concatenate %34, %53 in 1 : vector<1x32xf32>, vector<1x32xf32> -> vector<1x64xf32>
    %cst_26 = arith.constant dense<0.000000e+00> : vector<1x256xf32>
    %55 = tpu.matmul %54, %1, %cst_26 {dimension_numbers = #tpu.dot_dimension_numbers<[1], [0], [0], [1], [0, 0, 1, 1], [], []>} : vector<1x64xf32>, vector<64x256xf32>, vector<1x256xf32> -> vector<1x256xf32>
    %56 = vector.extract_strided_slice %10 {offsets = [1, 0], sizes = [1, 128], strides = [1, 1]} : vector<8x128xf32> to vector<1x128xf32>
    %57 = vector.extract_strided_slice %55 {offsets = [0, 0], sizes = [1, 128], strides = [1, 1]} : vector<1x256xf32> to vector<1x128xf32>
    %58 = arith.addf %56, %57 : vector<1x128xf32>
    %59 = arith.negf %58 : vector<1x128xf32>
    %60 = math.exp %59 : vector<1x128xf32>
    %cst_27 = arith.constant 1.000000e+00 : f32
    %61 = vector.broadcast %cst_27 : f32 to vector<1x128xf32>
    %62 = arith.addf %61, %60 : vector<1x128xf32>
    %63 = arith.divf %61, %62 : vector<1x128xf32>
    %64 = math.tanh %58 : vector<1x128xf32>
    %65 = vector.extract_strided_slice %63 {offsets = [0, 0], sizes = [1, 32], strides = [1, 1]} : vector<1x128xf32> to vector<1x32xf32>
    %66 = vector.extract_strided_slice %63 {offsets = [0, 32], sizes = [1, 32], strides = [1, 1]} : vector<1x128xf32> to vector<1x32xf32>
    %67 = vector.extract_strided_slice %64 {offsets = [0, 64], sizes = [1, 32], strides = [1, 1]} : vector<1x128xf32> to vector<1x32xf32>
    %68 = vector.extract_strided_slice %63 {offsets = [0, 96], sizes = [1, 32], strides = [1, 1]} : vector<1x128xf32> to vector<1x32xf32>
    %69 = arith.mulf %66, %32 : vector<1x32xf32>
    %70 = arith.mulf %65, %67 : vector<1x32xf32>
    %71 = arith.addf %69, %70 : vector<1x32xf32>
    %72 = math.tanh %71 : vector<1x32xf32>
    %73 = arith.mulf %68, %72 : vector<1x32xf32>
    %cst_28 = arith.constant dense<0.000000e+00> : vector<1x128xf32>
    %74 = tpu.matmul %73, %3, %cst_28 {dimension_numbers = #tpu.dot_dimension_numbers<[1], [0], [0], [1], [0, 0, 1, 1], [], []>} : vector<1x32xf32>, vector<32x128xf32>, vector<1x128xf32> -> vector<1x128xf32>
    %75 = arith.addf %74, %4 : vector<1x128xf32>
    %76 = vector.extract_strided_slice %55 {offsets = [0, 128], sizes = [1, 128], strides = [1, 1]} : vector<1x256xf32> to vector<1x128xf32>
    %77 = arith.addf %75, %76 : vector<1x128xf32>
    %78 = arith.negf %77 : vector<1x128xf32>
    %79 = math.exp %78 : vector<1x128xf32>
    %cst_29 = arith.constant 1.000000e+00 : f32
    %80 = vector.broadcast %cst_29 : f32 to vector<1x128xf32>
    %81 = arith.addf %80, %79 : vector<1x128xf32>
    %82 = arith.divf %80, %81 : vector<1x128xf32>
    %83 = math.tanh %77 : vector<1x128xf32>
    %84 = vector.extract_strided_slice %82 {offsets = [0, 0], sizes = [1, 32], strides = [1, 1]} : vector<1x128xf32> to vector<1x32xf32>
    %85 = vector.extract_strided_slice %82 {offsets = [0, 32], sizes = [1, 32], strides = [1, 1]} : vector<1x128xf32> to vector<1x32xf32>
    %86 = vector.extract_strided_slice %83 {offsets = [0, 64], sizes = [1, 32], strides = [1, 1]} : vector<1x128xf32> to vector<1x32xf32>
    %87 = vector.extract_strided_slice %82 {offsets = [0, 96], sizes = [1, 32], strides = [1, 1]} : vector<1x128xf32> to vector<1x32xf32>
    %88 = arith.mulf %85, %51 : vector<1x32xf32>
    %89 = arith.mulf %84, %86 : vector<1x32xf32>
    %90 = arith.addf %88, %89 : vector<1x32xf32>
    %91 = math.tanh %90 : vector<1x32xf32>
    %92 = arith.mulf %87, %91 : vector<1x32xf32>
    %93 = tpu.concatenate %73, %92 in 1 : vector<1x32xf32>, vector<1x32xf32> -> vector<1x64xf32>
    %cst_30 = arith.constant dense<0.000000e+00> : vector<1x256xf32>
    %94 = tpu.matmul %93, %1, %cst_30 {dimension_numbers = #tpu.dot_dimension_numbers<[1], [0], [0], [1], [0, 0, 1, 1], [], []>} : vector<1x64xf32>, vector<64x256xf32>, vector<1x256xf32> -> vector<1x256xf32>
    %95 = vector.extract_strided_slice %10 {offsets = [2, 0], sizes = [1, 128], strides = [1, 1]} : vector<8x128xf32> to vector<1x128xf32>
    %96 = vector.extract_strided_slice %94 {offsets = [0, 0], sizes = [1, 128], strides = [1, 1]} : vector<1x256xf32> to vector<1x128xf32>
    %97 = arith.addf %95, %96 : vector<1x128xf32>
    %98 = arith.negf %97 : vector<1x128xf32>
    %99 = math.exp %98 : vector<1x128xf32>
    %cst_31 = arith.constant 1.000000e+00 : f32
    %100 = vector.broadcast %cst_31 : f32 to vector<1x128xf32>
    %101 = arith.addf %100, %99 : vector<1x128xf32>
    %102 = arith.divf %100, %101 : vector<1x128xf32>
    %103 = math.tanh %97 : vector<1x128xf32>
    %104 = vector.extract_strided_slice %102 {offsets = [0, 0], sizes = [1, 32], strides = [1, 1]} : vector<1x128xf32> to vector<1x32xf32>
    %105 = vector.extract_strided_slice %102 {offsets = [0, 32], sizes = [1, 32], strides = [1, 1]} : vector<1x128xf32> to vector<1x32xf32>
    %106 = vector.extract_strided_slice %103 {offsets = [0, 64], sizes = [1, 32], strides = [1, 1]} : vector<1x128xf32> to vector<1x32xf32>
    %107 = vector.extract_strided_slice %102 {offsets = [0, 96], sizes = [1, 32], strides = [1, 1]} : vector<1x128xf32> to vector<1x32xf32>
    %108 = arith.mulf %105, %71 : vector<1x32xf32>
    %109 = arith.mulf %104, %106 : vector<1x32xf32>
    %110 = arith.addf %108, %109 : vector<1x32xf32>
    %111 = math.tanh %110 : vector<1x32xf32>
    %112 = arith.mulf %107, %111 : vector<1x32xf32>
    %cst_32 = arith.constant dense<0.000000e+00> : vector<1x128xf32>
    %113 = tpu.matmul %112, %3, %cst_32 {dimension_numbers = #tpu.dot_dimension_numbers<[1], [0], [0], [1], [0, 0, 1, 1], [], []>} : vector<1x32xf32>, vector<32x128xf32>, vector<1x128xf32> -> vector<1x128xf32>
    %114 = arith.addf %113, %4 : vector<1x128xf32>
    %115 = vector.extract_strided_slice %94 {offsets = [0, 128], sizes = [1, 128], strides = [1, 1]} : vector<1x256xf32> to vector<1x128xf32>
    %116 = arith.addf %114, %115 : vector<1x128xf32>
    %117 = arith.negf %116 : vector<1x128xf32>
    %118 = math.exp %117 : vector<1x128xf32>
    %cst_33 = arith.constant 1.000000e+00 : f32
    %119 = vector.broadcast %cst_33 : f32 to vector<1x128xf32>
    %120 = arith.addf %119, %118 : vector<1x128xf32>
    %121 = arith.divf %119, %120 : vector<1x128xf32>
    %122 = math.tanh %116 : vector<1x128xf32>
    %123 = vector.extract_strided_slice %121 {offsets = [0, 0], sizes = [1, 32], strides = [1, 1]} : vector<1x128xf32> to vector<1x32xf32>
    %124 = vector.extract_strided_slice %121 {offsets = [0, 32], sizes = [1, 32], strides = [1, 1]} : vector<1x128xf32> to vector<1x32xf32>
    %125 = vector.extract_strided_slice %122 {offsets = [0, 64], sizes = [1, 32], strides = [1, 1]} : vector<1x128xf32> to vector<1x32xf32>
    %126 = vector.extract_strided_slice %121 {offsets = [0, 96], sizes = [1, 32], strides = [1, 1]} : vector<1x128xf32> to vector<1x32xf32>
    %127 = arith.mulf %124, %90 : vector<1x32xf32>
    %128 = arith.mulf %123, %125 : vector<1x32xf32>
    %129 = arith.addf %127, %128 : vector<1x32xf32>
    %130 = math.tanh %129 : vector<1x32xf32>
    %131 = arith.mulf %126, %130 : vector<1x32xf32>
    %132 = tpu.concatenate %112, %131 in 1 : vector<1x32xf32>, vector<1x32xf32> -> vector<1x64xf32>
    %cst_34 = arith.constant dense<0.000000e+00> : vector<1x256xf32>
    %133 = tpu.matmul %132, %1, %cst_34 {dimension_numbers = #tpu.dot_dimension_numbers<[1], [0], [0], [1], [0, 0, 1, 1], [], []>} : vector<1x64xf32>, vector<64x256xf32>, vector<1x256xf32> -> vector<1x256xf32>
    %134 = vector.extract_strided_slice %10 {offsets = [3, 0], sizes = [1, 128], strides = [1, 1]} : vector<8x128xf32> to vector<1x128xf32>
    %135 = vector.extract_strided_slice %133 {offsets = [0, 0], sizes = [1, 128], strides = [1, 1]} : vector<1x256xf32> to vector<1x128xf32>
    %136 = arith.addf %134, %135 : vector<1x128xf32>
    %137 = arith.negf %136 : vector<1x128xf32>
    %138 = math.exp %137 : vector<1x128xf32>
    %cst_35 = arith.constant 1.000000e+00 : f32
    %139 = vector.broadcast %cst_35 : f32 to vector<1x128xf32>
    %140 = arith.addf %139, %138 : vector<1x128xf32>
    %141 = arith.divf %139, %140 : vector<1x128xf32>
    %142 = math.tanh %136 : vector<1x128xf32>
    %143 = vector.extract_strided_slice %141 {offsets = [0, 0], sizes = [1, 32], strides = [1, 1]} : vector<1x128xf32> to vector<1x32xf32>
    %144 = vector.extract_strided_slice %141 {offsets = [0, 32], sizes = [1, 32], strides = [1, 1]} : vector<1x128xf32> to vector<1x32xf32>
    %145 = vector.extract_strided_slice %142 {offsets = [0, 64], sizes = [1, 32], strides = [1, 1]} : vector<1x128xf32> to vector<1x32xf32>
    %146 = vector.extract_strided_slice %141 {offsets = [0, 96], sizes = [1, 32], strides = [1, 1]} : vector<1x128xf32> to vector<1x32xf32>
    %147 = arith.mulf %144, %110 : vector<1x32xf32>
    %148 = arith.mulf %143, %145 : vector<1x32xf32>
    %149 = arith.addf %147, %148 : vector<1x32xf32>
    %150 = math.tanh %149 : vector<1x32xf32>
    %151 = arith.mulf %146, %150 : vector<1x32xf32>
    %cst_36 = arith.constant dense<0.000000e+00> : vector<1x128xf32>
    %152 = tpu.matmul %151, %3, %cst_36 {dimension_numbers = #tpu.dot_dimension_numbers<[1], [0], [0], [1], [0, 0, 1, 1], [], []>} : vector<1x32xf32>, vector<32x128xf32>, vector<1x128xf32> -> vector<1x128xf32>
    %153 = arith.addf %152, %4 : vector<1x128xf32>
    %154 = vector.extract_strided_slice %133 {offsets = [0, 128], sizes = [1, 128], strides = [1, 1]} : vector<1x256xf32> to vector<1x128xf32>
    %155 = arith.addf %153, %154 : vector<1x128xf32>
    %156 = arith.negf %155 : vector<1x128xf32>
    %157 = math.exp %156 : vector<1x128xf32>
    %cst_37 = arith.constant 1.000000e+00 : f32
    %158 = vector.broadcast %cst_37 : f32 to vector<1x128xf32>
    %159 = arith.addf %158, %157 : vector<1x128xf32>
    %160 = arith.divf %158, %159 : vector<1x128xf32>
    %161 = math.tanh %155 : vector<1x128xf32>
    %162 = vector.extract_strided_slice %160 {offsets = [0, 0], sizes = [1, 32], strides = [1, 1]} : vector<1x128xf32> to vector<1x32xf32>
    %163 = vector.extract_strided_slice %160 {offsets = [0, 32], sizes = [1, 32], strides = [1, 1]} : vector<1x128xf32> to vector<1x32xf32>
    %164 = vector.extract_strided_slice %161 {offsets = [0, 64], sizes = [1, 32], strides = [1, 1]} : vector<1x128xf32> to vector<1x32xf32>
    %165 = vector.extract_strided_slice %160 {offsets = [0, 96], sizes = [1, 32], strides = [1, 1]} : vector<1x128xf32> to vector<1x32xf32>
    %166 = arith.mulf %163, %129 : vector<1x32xf32>
    %167 = arith.mulf %162, %164 : vector<1x32xf32>
    %168 = arith.addf %166, %167 : vector<1x32xf32>
    %169 = math.tanh %168 : vector<1x32xf32>
    %170 = arith.mulf %165, %169 : vector<1x32xf32>
    %171 = tpu.concatenate %151, %170 in 1 : vector<1x32xf32>, vector<1x32xf32> -> vector<1x64xf32>
    %cst_38 = arith.constant dense<0.000000e+00> : vector<1x256xf32>
    %172 = tpu.matmul %171, %1, %cst_38 {dimension_numbers = #tpu.dot_dimension_numbers<[1], [0], [0], [1], [0, 0, 1, 1], [], []>} : vector<1x64xf32>, vector<64x256xf32>, vector<1x256xf32> -> vector<1x256xf32>
    %173 = vector.extract_strided_slice %10 {offsets = [4, 0], sizes = [1, 128], strides = [1, 1]} : vector<8x128xf32> to vector<1x128xf32>
    %174 = vector.extract_strided_slice %172 {offsets = [0, 0], sizes = [1, 128], strides = [1, 1]} : vector<1x256xf32> to vector<1x128xf32>
    %175 = arith.addf %173, %174 : vector<1x128xf32>
    %176 = arith.negf %175 : vector<1x128xf32>
    %177 = math.exp %176 : vector<1x128xf32>
    %cst_39 = arith.constant 1.000000e+00 : f32
    %178 = vector.broadcast %cst_39 : f32 to vector<1x128xf32>
    %179 = arith.addf %178, %177 : vector<1x128xf32>
    %180 = arith.divf %178, %179 : vector<1x128xf32>
    %181 = math.tanh %175 : vector<1x128xf32>
    %182 = vector.extract_strided_slice %180 {offsets = [0, 0], sizes = [1, 32], strides = [1, 1]} : vector<1x128xf32> to vector<1x32xf32>
    %183 = vector.extract_strided_slice %180 {offsets = [0, 32], sizes = [1, 32], strides = [1, 1]} : vector<1x128xf32> to vector<1x32xf32>
    %184 = vector.extract_strided_slice %181 {offsets = [0, 64], sizes = [1, 32], strides = [1, 1]} : vector<1x128xf32> to vector<1x32xf32>
    %185 = vector.extract_strided_slice %180 {offsets = [0, 96], sizes = [1, 32], strides = [1, 1]} : vector<1x128xf32> to vector<1x32xf32>
    %186 = arith.mulf %183, %149 : vector<1x32xf32>
    %187 = arith.mulf %182, %184 : vector<1x32xf32>
    %188 = arith.addf %186, %187 : vector<1x32xf32>
    %189 = math.tanh %188 : vector<1x32xf32>
    %190 = arith.mulf %185, %189 : vector<1x32xf32>
    %cst_40 = arith.constant dense<0.000000e+00> : vector<1x128xf32>
    %191 = tpu.matmul %190, %3, %cst_40 {dimension_numbers = #tpu.dot_dimension_numbers<[1], [0], [0], [1], [0, 0, 1, 1], [], []>} : vector<1x32xf32>, vector<32x128xf32>, vector<1x128xf32> -> vector<1x128xf32>
    %192 = arith.addf %191, %4 : vector<1x128xf32>
    %193 = vector.extract_strided_slice %172 {offsets = [0, 128], sizes = [1, 128], strides = [1, 1]} : vector<1x256xf32> to vector<1x128xf32>
    %194 = arith.addf %192, %193 : vector<1x128xf32>
    %195 = arith.negf %194 : vector<1x128xf32>
    %196 = math.exp %195 : vector<1x128xf32>
    %cst_41 = arith.constant 1.000000e+00 : f32
    %197 = vector.broadcast %cst_41 : f32 to vector<1x128xf32>
    %198 = arith.addf %197, %196 : vector<1x128xf32>
    %199 = arith.divf %197, %198 : vector<1x128xf32>
    %200 = math.tanh %194 : vector<1x128xf32>
    %201 = vector.extract_strided_slice %199 {offsets = [0, 0], sizes = [1, 32], strides = [1, 1]} : vector<1x128xf32> to vector<1x32xf32>
    %202 = vector.extract_strided_slice %199 {offsets = [0, 32], sizes = [1, 32], strides = [1, 1]} : vector<1x128xf32> to vector<1x32xf32>
    %203 = vector.extract_strided_slice %200 {offsets = [0, 64], sizes = [1, 32], strides = [1, 1]} : vector<1x128xf32> to vector<1x32xf32>
    %204 = vector.extract_strided_slice %199 {offsets = [0, 96], sizes = [1, 32], strides = [1, 1]} : vector<1x128xf32> to vector<1x32xf32>
    %205 = arith.mulf %202, %168 : vector<1x32xf32>
    %206 = arith.mulf %201, %203 : vector<1x32xf32>
    %207 = arith.addf %205, %206 : vector<1x32xf32>
    %208 = math.tanh %207 : vector<1x32xf32>
    %209 = arith.mulf %204, %208 : vector<1x32xf32>
    %210 = tpu.concatenate %190, %209 in 1 : vector<1x32xf32>, vector<1x32xf32> -> vector<1x64xf32>
    %cst_42 = arith.constant dense<0.000000e+00> : vector<1x256xf32>
    %211 = tpu.matmul %210, %1, %cst_42 {dimension_numbers = #tpu.dot_dimension_numbers<[1], [0], [0], [1], [0, 0, 1, 1], [], []>} : vector<1x64xf32>, vector<64x256xf32>, vector<1x256xf32> -> vector<1x256xf32>
    %212 = vector.extract_strided_slice %10 {offsets = [5, 0], sizes = [1, 128], strides = [1, 1]} : vector<8x128xf32> to vector<1x128xf32>
    %213 = vector.extract_strided_slice %211 {offsets = [0, 0], sizes = [1, 128], strides = [1, 1]} : vector<1x256xf32> to vector<1x128xf32>
    %214 = arith.addf %212, %213 : vector<1x128xf32>
    %215 = arith.negf %214 : vector<1x128xf32>
    %216 = math.exp %215 : vector<1x128xf32>
    %cst_43 = arith.constant 1.000000e+00 : f32
    %217 = vector.broadcast %cst_43 : f32 to vector<1x128xf32>
    %218 = arith.addf %217, %216 : vector<1x128xf32>
    %219 = arith.divf %217, %218 : vector<1x128xf32>
    %220 = math.tanh %214 : vector<1x128xf32>
    %221 = vector.extract_strided_slice %219 {offsets = [0, 0], sizes = [1, 32], strides = [1, 1]} : vector<1x128xf32> to vector<1x32xf32>
    %222 = vector.extract_strided_slice %219 {offsets = [0, 32], sizes = [1, 32], strides = [1, 1]} : vector<1x128xf32> to vector<1x32xf32>
    %223 = vector.extract_strided_slice %220 {offsets = [0, 64], sizes = [1, 32], strides = [1, 1]} : vector<1x128xf32> to vector<1x32xf32>
    %224 = vector.extract_strided_slice %219 {offsets = [0, 96], sizes = [1, 32], strides = [1, 1]} : vector<1x128xf32> to vector<1x32xf32>
    %225 = arith.mulf %222, %188 : vector<1x32xf32>
    %226 = arith.mulf %221, %223 : vector<1x32xf32>
    %227 = arith.addf %225, %226 : vector<1x32xf32>
    %228 = math.tanh %227 : vector<1x32xf32>
    %229 = arith.mulf %224, %228 : vector<1x32xf32>
    %cst_44 = arith.constant dense<0.000000e+00> : vector<1x128xf32>
    %230 = tpu.matmul %229, %3, %cst_44 {dimension_numbers = #tpu.dot_dimension_numbers<[1], [0], [0], [1], [0, 0, 1, 1], [], []>} : vector<1x32xf32>, vector<32x128xf32>, vector<1x128xf32> -> vector<1x128xf32>
    %231 = arith.addf %230, %4 : vector<1x128xf32>
    %232 = vector.extract_strided_slice %211 {offsets = [0, 128], sizes = [1, 128], strides = [1, 1]} : vector<1x256xf32> to vector<1x128xf32>
    %233 = arith.addf %231, %232 : vector<1x128xf32>
    %234 = arith.negf %233 : vector<1x128xf32>
    %235 = math.exp %234 : vector<1x128xf32>
    %cst_45 = arith.constant 1.000000e+00 : f32
    %236 = vector.broadcast %cst_45 : f32 to vector<1x128xf32>
    %237 = arith.addf %236, %235 : vector<1x128xf32>
    %238 = arith.divf %236, %237 : vector<1x128xf32>
    %239 = math.tanh %233 : vector<1x128xf32>
    %240 = vector.extract_strided_slice %238 {offsets = [0, 0], sizes = [1, 32], strides = [1, 1]} : vector<1x128xf32> to vector<1x32xf32>
    %241 = vector.extract_strided_slice %238 {offsets = [0, 32], sizes = [1, 32], strides = [1, 1]} : vector<1x128xf32> to vector<1x32xf32>
    %242 = vector.extract_strided_slice %239 {offsets = [0, 64], sizes = [1, 32], strides = [1, 1]} : vector<1x128xf32> to vector<1x32xf32>
    %243 = vector.extract_strided_slice %238 {offsets = [0, 96], sizes = [1, 32], strides = [1, 1]} : vector<1x128xf32> to vector<1x32xf32>
    %244 = arith.mulf %241, %207 : vector<1x32xf32>
    %245 = arith.mulf %240, %242 : vector<1x32xf32>
    %246 = arith.addf %244, %245 : vector<1x32xf32>
    %247 = math.tanh %246 : vector<1x32xf32>
    %248 = arith.mulf %243, %247 : vector<1x32xf32>
    %249 = tpu.concatenate %229, %248 in 1 : vector<1x32xf32>, vector<1x32xf32> -> vector<1x64xf32>
    %cst_46 = arith.constant dense<0.000000e+00> : vector<1x256xf32>
    %250 = tpu.matmul %249, %1, %cst_46 {dimension_numbers = #tpu.dot_dimension_numbers<[1], [0], [0], [1], [0, 0, 1, 1], [], []>} : vector<1x64xf32>, vector<64x256xf32>, vector<1x256xf32> -> vector<1x256xf32>
    %251 = vector.extract_strided_slice %10 {offsets = [6, 0], sizes = [1, 128], strides = [1, 1]} : vector<8x128xf32> to vector<1x128xf32>
    %252 = vector.extract_strided_slice %250 {offsets = [0, 0], sizes = [1, 128], strides = [1, 1]} : vector<1x256xf32> to vector<1x128xf32>
    %253 = arith.addf %251, %252 : vector<1x128xf32>
    %254 = arith.negf %253 : vector<1x128xf32>
    %255 = math.exp %254 : vector<1x128xf32>
    %cst_47 = arith.constant 1.000000e+00 : f32
    %256 = vector.broadcast %cst_47 : f32 to vector<1x128xf32>
    %257 = arith.addf %256, %255 : vector<1x128xf32>
    %258 = arith.divf %256, %257 : vector<1x128xf32>
    %259 = math.tanh %253 : vector<1x128xf32>
    %260 = vector.extract_strided_slice %258 {offsets = [0, 0], sizes = [1, 32], strides = [1, 1]} : vector<1x128xf32> to vector<1x32xf32>
    %261 = vector.extract_strided_slice %258 {offsets = [0, 32], sizes = [1, 32], strides = [1, 1]} : vector<1x128xf32> to vector<1x32xf32>
    %262 = vector.extract_strided_slice %259 {offsets = [0, 64], sizes = [1, 32], strides = [1, 1]} : vector<1x128xf32> to vector<1x32xf32>
    %263 = vector.extract_strided_slice %258 {offsets = [0, 96], sizes = [1, 32], strides = [1, 1]} : vector<1x128xf32> to vector<1x32xf32>
    %264 = arith.mulf %261, %227 : vector<1x32xf32>
    %265 = arith.mulf %260, %262 : vector<1x32xf32>
    %266 = arith.addf %264, %265 : vector<1x32xf32>
    %267 = math.tanh %266 : vector<1x32xf32>
    %268 = arith.mulf %263, %267 : vector<1x32xf32>
    %cst_48 = arith.constant dense<0.000000e+00> : vector<1x128xf32>
    %269 = tpu.matmul %268, %3, %cst_48 {dimension_numbers = #tpu.dot_dimension_numbers<[1], [0], [0], [1], [0, 0, 1, 1], [], []>} : vector<1x32xf32>, vector<32x128xf32>, vector<1x128xf32> -> vector<1x128xf32>
    %270 = arith.addf %269, %4 : vector<1x128xf32>
    %271 = vector.extract_strided_slice %250 {offsets = [0, 128], sizes = [1, 128], strides = [1, 1]} : vector<1x256xf32> to vector<1x128xf32>
    %272 = arith.addf %270, %271 : vector<1x128xf32>
    %273 = arith.negf %272 : vector<1x128xf32>
    %274 = math.exp %273 : vector<1x128xf32>
    %cst_49 = arith.constant 1.000000e+00 : f32
    %275 = vector.broadcast %cst_49 : f32 to vector<1x128xf32>
    %276 = arith.addf %275, %274 : vector<1x128xf32>
    %277 = arith.divf %275, %276 : vector<1x128xf32>
    %278 = math.tanh %272 : vector<1x128xf32>
    %279 = vector.extract_strided_slice %277 {offsets = [0, 0], sizes = [1, 32], strides = [1, 1]} : vector<1x128xf32> to vector<1x32xf32>
    %280 = vector.extract_strided_slice %277 {offsets = [0, 32], sizes = [1, 32], strides = [1, 1]} : vector<1x128xf32> to vector<1x32xf32>
    %281 = vector.extract_strided_slice %278 {offsets = [0, 64], sizes = [1, 32], strides = [1, 1]} : vector<1x128xf32> to vector<1x32xf32>
    %282 = vector.extract_strided_slice %277 {offsets = [0, 96], sizes = [1, 32], strides = [1, 1]} : vector<1x128xf32> to vector<1x32xf32>
    %283 = arith.mulf %280, %246 : vector<1x32xf32>
    %284 = arith.mulf %279, %281 : vector<1x32xf32>
    %285 = arith.addf %283, %284 : vector<1x32xf32>
    %286 = math.tanh %285 : vector<1x32xf32>
    %287 = arith.mulf %282, %286 : vector<1x32xf32>
    %288 = tpu.concatenate %268, %287 in 1 : vector<1x32xf32>, vector<1x32xf32> -> vector<1x64xf32>
    %cst_50 = arith.constant dense<0.000000e+00> : vector<1x256xf32>
    %289 = tpu.matmul %288, %1, %cst_50 {dimension_numbers = #tpu.dot_dimension_numbers<[1], [0], [0], [1], [0, 0, 1, 1], [], []>} : vector<1x64xf32>, vector<64x256xf32>, vector<1x256xf32> -> vector<1x256xf32>
    %290 = vector.extract_strided_slice %10 {offsets = [7, 0], sizes = [1, 128], strides = [1, 1]} : vector<8x128xf32> to vector<1x128xf32>
    %291 = vector.extract_strided_slice %289 {offsets = [0, 0], sizes = [1, 128], strides = [1, 1]} : vector<1x256xf32> to vector<1x128xf32>
    %292 = arith.addf %290, %291 : vector<1x128xf32>
    %293 = arith.negf %292 : vector<1x128xf32>
    %294 = math.exp %293 : vector<1x128xf32>
    %cst_51 = arith.constant 1.000000e+00 : f32
    %295 = vector.broadcast %cst_51 : f32 to vector<1x128xf32>
    %296 = arith.addf %295, %294 : vector<1x128xf32>
    %297 = arith.divf %295, %296 : vector<1x128xf32>
    %298 = math.tanh %292 : vector<1x128xf32>
    %299 = vector.extract_strided_slice %297 {offsets = [0, 0], sizes = [1, 32], strides = [1, 1]} : vector<1x128xf32> to vector<1x32xf32>
    %300 = vector.extract_strided_slice %297 {offsets = [0, 32], sizes = [1, 32], strides = [1, 1]} : vector<1x128xf32> to vector<1x32xf32>
    %301 = vector.extract_strided_slice %298 {offsets = [0, 64], sizes = [1, 32], strides = [1, 1]} : vector<1x128xf32> to vector<1x32xf32>
    %302 = vector.extract_strided_slice %297 {offsets = [0, 96], sizes = [1, 32], strides = [1, 1]} : vector<1x128xf32> to vector<1x32xf32>
    %303 = arith.mulf %300, %266 : vector<1x32xf32>
    %304 = arith.mulf %299, %301 : vector<1x32xf32>
    %305 = arith.addf %303, %304 : vector<1x32xf32>
    %306 = math.tanh %305 : vector<1x32xf32>
    %307 = arith.mulf %302, %306 : vector<1x32xf32>
    %cst_52 = arith.constant dense<0.000000e+00> : vector<1x128xf32>
    %308 = tpu.matmul %307, %3, %cst_52 {dimension_numbers = #tpu.dot_dimension_numbers<[1], [0], [0], [1], [0, 0, 1, 1], [], []>} : vector<1x32xf32>, vector<32x128xf32>, vector<1x128xf32> -> vector<1x128xf32>
    %309 = arith.addf %308, %4 : vector<1x128xf32>
    %310 = vector.extract_strided_slice %289 {offsets = [0, 128], sizes = [1, 128], strides = [1, 1]} : vector<1x256xf32> to vector<1x128xf32>
    %311 = arith.addf %309, %310 : vector<1x128xf32>
    %312 = arith.negf %311 : vector<1x128xf32>
    %313 = math.exp %312 : vector<1x128xf32>
    %cst_53 = arith.constant 1.000000e+00 : f32
    %314 = vector.broadcast %cst_53 : f32 to vector<1x128xf32>
    %315 = arith.addf %314, %313 : vector<1x128xf32>
    %316 = arith.divf %314, %315 : vector<1x128xf32>
    %317 = math.tanh %311 : vector<1x128xf32>
    %318 = vector.extract_strided_slice %316 {offsets = [0, 0], sizes = [1, 32], strides = [1, 1]} : vector<1x128xf32> to vector<1x32xf32>
    %319 = vector.extract_strided_slice %316 {offsets = [0, 32], sizes = [1, 32], strides = [1, 1]} : vector<1x128xf32> to vector<1x32xf32>
    %320 = vector.extract_strided_slice %317 {offsets = [0, 64], sizes = [1, 32], strides = [1, 1]} : vector<1x128xf32> to vector<1x32xf32>
    %321 = vector.extract_strided_slice %316 {offsets = [0, 96], sizes = [1, 32], strides = [1, 1]} : vector<1x128xf32> to vector<1x32xf32>
    %322 = arith.mulf %319, %285 : vector<1x32xf32>
    %323 = arith.mulf %318, %320 : vector<1x32xf32>
    %324 = arith.addf %322, %323 : vector<1x32xf32>
    %325 = math.tanh %324 : vector<1x32xf32>
    %326 = arith.mulf %321, %325 : vector<1x32xf32>
    %cst_54 = arith.constant dense<0.000000e+00> : vector<1x128xf32>
    %327 = tpu.matmul %326, %5, %cst_54 {dimension_numbers = #tpu.dot_dimension_numbers<[1], [0], [0], [1], [0, 0, 1, 1], [], []>} : vector<1x32xf32>, vector<32x128xf32>, vector<1x128xf32> -> vector<1x128xf32>
    %328 = arith.addf %327, %6 : vector<1x128xf32>
    %c0_55 = arith.constant 0 : index
    %c0_56 = arith.constant 0 : index
    %329 = vector.load %arg10[%c0_55, %c0_56] : memref<1x128xf32, #tpu.memory_space<vmem>>, vector<1x128xf32>
    tpu.vector_store %arg10[%c0_55, %c0_56], %328 {strides = array<i32>} : memref<1x128xf32, #tpu.memory_space<vmem>>, vector<1x128xf32>,
    %c0_57 = arith.constant 0 : index
    %c0_58 = arith.constant 0 : index
    %330 = vector.load %arg11[%c0_57, %c0_58] : memref<2x32xf32, #tpu.memory_space<vmem>>, vector<1x32xf32>
    tpu.vector_store %arg11[%c0_57, %c0_58], %307 {strides = array<i32>} : memref<2x32xf32, #tpu.memory_space<vmem>>, vector<1x32xf32>,
    %c1_59 = arith.constant 1 : index
    %c0_60 = arith.constant 0 : index
    %331 = vector.load %arg11[%c1_59, %c0_60] : memref<2x32xf32, #tpu.memory_space<vmem>>, vector<1x32xf32>
    tpu.vector_store %arg11[%c1_59, %c0_60], %326 {strides = array<i32>} : memref<2x32xf32, #tpu.memory_space<vmem>>, vector<1x32xf32>,
    %c0_61 = arith.constant 0 : index
    %c0_62 = arith.constant 0 : index
    %332 = vector.load %arg12[%c0_61, %c0_62] : memref<2x32xf32, #tpu.memory_space<vmem>>, vector<1x32xf32>
    tpu.vector_store %arg12[%c0_61, %c0_62], %305 {strides = array<i32>} : memref<2x32xf32, #tpu.memory_space<vmem>>, vector<1x32xf32>,
    %c1_63 = arith.constant 1 : index
    %c0_64 = arith.constant 0 : index
    %333 = vector.load %arg12[%c1_63, %c0_64] : memref<2x32xf32, #tpu.memory_space<vmem>>, vector<1x32xf32>
    tpu.vector_store %arg12[%c1_63, %c0_64], %324 {strides = array<i32>} : memref<2x32xf32, #tpu.memory_space<vmem>>, vector<1x32xf32>,
    return
  }
}

</mosaic_0001>

<llo_original>
// kernel: tpu_custom_call.1
$region0: #{tpu_custom_call.1}
  #allocation0 [shape = 'u32[]', space=smem, size = 0x4, offset = 0x4, fixed_abs, tag = 'smem constant byte address 0x4 - core index']
  #allocation1 [shape = 'u32[72,128]{1,0:T(1,128)}', space=vmem, size = 0x9000, scoped, tag = 'internal scratch']
  %s0 = inlined_call_operand.hbm [shape: f32[8,57], index: 0, kind: input, shape index: {}]
  %s1 = inlined_call_operand.hbm [shape: f32[57,128], index: 1, kind: input, shape index: {}]
  %s2 = inlined_call_operand.hbm [shape: f32[64,256], index: 2, kind: input, shape index: {}]
  %s3 = inlined_call_operand.hbm [shape: f32[1,128], index: 3, kind: input, shape index: {}]
  %s4 = inlined_call_operand.hbm [shape: f32[32,128], index: 4, kind: input, shape index: {}]
  %s5 = inlined_call_operand.hbm [shape: f32[1,128], index: 5, kind: input, shape index: {}]
  %s6 = inlined_call_operand.vmem [shape: f32[2,32], index: 6, kind: input, shape index: {}]
  %s7 = inlined_call_operand.vmem [shape: f32[2,32], index: 7, kind: input, shape index: {}]
  %s8 = inlined_call_operand.hbm [shape: f32[32,128], index: 8, kind: input, shape index: {}]
  %s9 = inlined_call_operand.vmem [shape: f32[1,128], index: 9, kind: input, shape index: {}]
  %s10 = inlined_call_operand.hbm [shape: f32[1,128], index: 10, kind: output, shape index: {0}]
  %s11 = inlined_call_operand.hbm [shape: f32[2,32], index: 11, kind: output, shape index: {1}]
  %s12 = inlined_call_operand.hbm [shape: f32[2,32], index: 12, kind: output, shape index: {2}]
  %13 = xla_tuple %s10, %s11, %s12
  %s14 = sld [smem:[#allocation0]]
  $region94: #{tpu_custom_call.1} parent=0
    _
  %s16 = ssub.s32 1, %s14
  %s17 = scalar_select 0, %s16, %s14
  $region1: #{tpu_custom_call.1} parent=0
    #allocation2 [shape = 'u8[4096]{0}', space=vmem, size = 0x1000, scoped, tag = 'input window, operand 0, single buffered']
    #allocation3 [shape = 's32[1]{0}', space=sflag, size = 0x4, scoped, tag = 'scoped memory for tpu_custom_call.1']
    #allocation4 [shape = 's32[1]{0}', space=sflag, size = 0x4, scoped, tag = 'scoped memory for tpu_custom_call.1']
    #allocation5 [shape = 'u8[32768]{0}', space=vmem, size = 0x8000, scoped, tag = 'input window, operand 1, single buffered']
    #allocation6 [shape = 's32[1]{0}', space=sflag, size = 0x4, scoped, tag = 'scoped memory for tpu_custom_call.1']
    #allocation7 [shape = 'u8[65536]{0}', space=vmem, size = 0x10000, scoped, tag = 'input window, operand 2, single buffered']
    #allocation8 [shape = 'u8[512]{0}', space=vmem, size = 0x400, scoped, tag = 'input window, operand 3, single buffered']
    #allocation9 [shape = 's32[1]{0}', space=sflag, size = 0x4, scoped, tag = 'scoped memory for tpu_custom_call.1']
    #allocation10 [shape = 'u8[16384]{0}', space=vmem, size = 0x4000, scoped, tag = 'input window, operand 4, single buffered']
    #allocation11 [shape = 'u8[512]{0}', space=vmem, size = 0x400, scoped, tag = 'input window, operand 5, single buffered']
    #allocation12 [shape = 's32[1]{0}', space=sflag, size = 0x4, scoped, tag = 'scoped memory for tpu_custom_call.1']
    #allocation13 [shape = 'u8[16384]{0}', space=vmem, size = 0x4000, scoped, tag = 'input window, operand 8, single buffered']
    #allocation14 [shape = 'u8[512]{0}', space=vmem, size = 0x400, scoped, tag = 'output window, operand 0, single buffered']
    #allocation15 [shape = 'u8[1024]{0}', space=vmem, size = 0x400, scoped, tag = 'output window, operand 1, single buffered']
    #allocation16 [shape = 's32[1]{0}', space=sflag, size = 0x4, scoped, tag = 'scoped memory for tpu_custom_call.1']
    #allocation17 [shape = 'u8[1024]{0}', space=vmem, size = 0x400, scoped, tag = 'output window, operand 2, single buffered']
    %18 = vsyncpa [#allocation3], 0
    %19 = vsyncpa [#allocation6], 0
    %20 = vsyncpa [#allocation9], 0
    %21 = vsyncpa [#allocation12], 0
    %22 = vsyncpa [#allocation4], 0
    %23 = vsyncpa [#allocation16], 0
    // Predicated region
    $region2: #{tpu_custom_call.1} parent=1 // pred_check
      _
    $region3: #{tpu_custom_call.1} parent=1 // pred_check_branch
      %25 = sbr.rel (0) target = $region5
    $region4: #{tpu_custom_call.1} parent=1 // pred_region
      %27 = vsyncadd [#allocation3], 0
      %s29 = sshll.u32 %s0, 4
      %s30 = int_to_ptr.hbm [resolvable:$true] %s29
      %s31 = sshll.u32 [#allocation2], 4
      %s32 = int_to_ptr.vmem [resolvable:$true] %s31
      %34 = dma.hbm_to_vmem [thread:$0]  %s30, 128, %s32, [#allocation3]
    $region5: #{tpu_custom_call.1} parent=1 // pred_fallthru
      _
    // Predicated region
    $region6: #{tpu_custom_call.1} parent=1 // pred_check
      _
    $region7: #{tpu_custom_call.1} parent=1 // pred_check_branch
      %36 = sbr.rel (0) target = $region9
    $region8: #{tpu_custom_call.1} parent=1 // pred_region
      %38 = vsyncadd [#allocation6], 0
      %s39 = sshll.u32 %s1, 4
      %s40 = int_to_ptr.hbm [resolvable:$true] %s39
      %s41 = sshll.u32 [#allocation5], 4
      %s42 = int_to_ptr.vmem [resolvable:$true] %s41
      %47 = dma.hbm_to_vmem [thread:$0]  %s40, 1024, %s42, [#allocation6], 128, 128, 8
    $region9: #{tpu_custom_call.1} parent=1 // pred_fallthru
      _
    // Predicated region
    $region10: #{tpu_custom_call.1} parent=1 // pred_check
      _
    $region11: #{tpu_custom_call.1} parent=1 // pred_check_branch
      %49 = sbr.rel (0) target = $region13
    $region12: #{tpu_custom_call.1} parent=1 // pred_region
      %51 = vsyncadd [#allocation6], 0
      %s52 = sshll.u32 %s2, 4
      %s53 = int_to_ptr.hbm [resolvable:$true] %s52
      %s54 = sshll.u32 [#allocation7], 4
      %s55 = int_to_ptr.vmem [resolvable:$true] %s54
      %60 = dma.hbm_to_vmem [thread:$0]  %s53, 2048, %s55, [#allocation6], 256, 256, 16
    $region13: #{tpu_custom_call.1} parent=1 // pred_fallthru
      _
    // Predicated region
    $region14: #{tpu_custom_call.1} parent=1 // pred_check
      _
    $region15: #{tpu_custom_call.1} parent=1 // pred_check_branch
      %62 = sbr.rel (0) target = $region17
    $region16: #{tpu_custom_call.1} parent=1 // pred_region
      %64 = vsyncadd [#allocation9], 0
      %s66 = sshll.u32 %s3, 4
      %s67 = int_to_ptr.hbm [resolvable:$true] %s66
      %s68 = sshll.u32 [#allocation8], 4
      %s69 = int_to_ptr.vmem [resolvable:$true] %s68
      %71 = dma.hbm_to_vmem [thread:$0]  %s67, 16, %s69, [#allocation9]
    $region17: #{tpu_custom_call.1} parent=1 // pred_fallthru
      _
    // Predicated region
    $region18: #{tpu_custom_call.1} parent=1 // pred_check
      _
    $region19: #{tpu_custom_call.1} parent=1 // pred_check_branch
      %73 = sbr.rel (0) target = $region21
    $region20: #{tpu_custom_call.1} parent=1 // pred_region
      %75 = vsyncadd [#allocation9], 0
      %s76 = sshll.u32 %s4, 4
      %s77 = int_to_ptr.hbm [resolvable:$true] %s76
      %s78 = sshll.u32 [#allocation10], 4
      %s79 = int_to_ptr.vmem [resolvable:$true] %s78
      %84 = dma.hbm_to_vmem [thread:$0]  %s77, 512, %s79, [#allocation9], 128, 128, 8
    $region21: #{tpu_custom_call.1} parent=1 // pred_fallthru
      _
    // Predicated region
    $region22: #{tpu_custom_call.1} parent=1 // pred_check
      _
    $region23: #{tpu_custom_call.1} parent=1 // pred_check_branch
      %86 = sbr.rel (0) target = $region25
    $region24: #{tpu_custom_call.1} parent=1 // pred_region
      %88 = vsyncadd [#allocation12], 0
      %s90 = sshll.u32 %s5, 4
      %s91 = int_to_ptr.hbm [resolvable:$true] %s90
      %s92 = sshll.u32 [#allocation11], 4
      %s93 = int_to_ptr.vmem [resolvable:$true] %s92
      %95 = dma.hbm_to_vmem [thread:$0]  %s91, 16, %s93, [#allocation12]
    $region25: #{tpu_custom_call.1} parent=1 // pred_fallthru
      _
    // Predicated region
    $region26: #{tpu_custom_call.1} parent=1 // pred_check
      _
    $region27: #{tpu_custom_call.1} parent=1 // pred_check_branch
      %97 = sbr.rel (0) target = $region29
    $region28: #{tpu_custom_call.1} parent=1 // pred_region
      _
    $region29: #{tpu_custom_call.1} parent=1 // pred_fallthru
      _
    // Predicated region
    $region30: #{tpu_custom_call.1} parent=1 // pred_check
      _
    $region31: #{tpu_custom_call.1} parent=1 // pred_check_branch
      %99 = sbr.rel (0) target = $region33
    $region32: #{tpu_custom_call.1} parent=1 // pred_region
      _
    $region33: #{tpu_custom_call.1} parent=1 // pred_fallthru
      _
    // Predicated region
    $region34: #{tpu_custom_call.1} parent=1 // pred_check
      _
    $region35: #{tpu_custom_call.1} parent=1 // pred_check_branch
      %101 = sbr.rel (0) target = $region37
    $region36: #{tpu_custom_call.1} parent=1 // pred_region
      %103 = vsyncadd [#allocation12], 0
      %s104 = sshll.u32 %s8, 4
      %s105 = int_to_ptr.hbm [resolvable:$true] %s104
      %s106 = sshll.u32 [#allocation13], 4
      %s107 = int_to_ptr.vmem [resolvable:$true] %s106
      %112 = dma.hbm_to_vmem [thread:$0]  %s105, 512, %s107, [#allocation12], 128, 128, 8
    $region37: #{tpu_custom_call.1} parent=1 // pred_fallthru
      _
    // Predicated region
    $region38: #{tpu_custom_call.1} parent=1 // pred_check
      _
    $region39: #{tpu_custom_call.1} parent=1 // pred_check_branch
      %114 = sbr.rel (0) target = $region41
    $region40: #{tpu_custom_call.1} parent=1 // pred_region
      _
    $region41: #{tpu_custom_call.1} parent=1 // pred_fallthru
      _
    // Predicated region
    $region42: #{tpu_custom_call.1} parent=1 // pred_check
      _
    $region43: #{tpu_custom_call.1} parent=1 // pred_check_branch
      %116 = sbr.rel (0) target = $region45
    $region44: #{tpu_custom_call.1} parent=1 // pred_region
      %118 = dma.done [#allocation3], 128
    $region45: #{tpu_custom_call.1} parent=1 // pred_fallthru
      _
    // Predicated region
    $region46: #{tpu_custom_call.1} parent=1 // pred_check
      _
    $region47: #{tpu_custom_call.1} parent=1 // pred_check_branch
      %120 = sbr.rel (0) target = $region49
    $region48: #{tpu_custom_call.1} parent=1 // pred_region
      %122 = dma.done [#allocation6], 1024
    $region49: #{tpu_custom_call.1} parent=1 // pred_fallthru
      _
    // Predicated region
    $region50: #{tpu_custom_call.1} parent=1 // pred_check
      _
    $region51: #{tpu_custom_call.1} parent=1 // pred_check_branch
      %124 = sbr.rel (0) target = $region53
    $region52: #{tpu_custom_call.1} parent=1 // pred_region
      %126 = dma.done [#allocation6], 2048
    $region53: #{tpu_custom_call.1} parent=1 // pred_fallthru
      _
    // Predicated region
    $region54: #{tpu_custom_call.1} parent=1 // pred_check
      _
    $region55: #{tpu_custom_call.1} parent=1 // pred_check_branch
      %128 = sbr.rel (0) target = $region57
    $region56: #{tpu_custom_call.1} parent=1 // pred_region
      %130 = dma.done [#allocation9], 16
    $region57: #{tpu_custom_call.1} parent=1 // pred_fallthru
      _
    // Predicated region
    $region58: #{tpu_custom_call.1} parent=1 // pred_check
      _
    $region59: #{tpu_custom_call.1} parent=1 // pred_check_branch
      %132 = sbr.rel (0) target = $region61
    $region60: #{tpu_custom_call.1} parent=1 // pred_region
      %134 = dma.done [#allocation9], 512
    $region61: #{tpu_custom_call.1} parent=1 // pred_fallthru
      _
    // Predicated region
    $region62: #{tpu_custom_call.1} parent=1 // pred_check
      _
    $region63: #{tpu_custom_call.1} parent=1 // pred_check_branch
      %136 = sbr.rel (0) target = $region65
    $region64: #{tpu_custom_call.1} parent=1 // pred_region
      %138 = dma.done [#allocation12], 16
    $region65: #{tpu_custom_call.1} parent=1 // pred_fallthru
      _
    // Predicated region
    $region66: #{tpu_custom_call.1} parent=1 // pred_check
      _
    $region67: #{tpu_custom_call.1} parent=1 // pred_check_branch
      %140 = sbr.rel (0) target = $region69
    $region68: #{tpu_custom_call.1} parent=1 // pred_region
      %142 = dma.done [#allocation12], 512
    $region69: #{tpu_custom_call.1} parent=1 // pred_fallthru
      _
    %v143 = vld [vmem:[#allocation5] sm:$0xff]
    %v144 = vld [vmem:[#allocation5 + $0x8] sm:$0xff]
    %v145 = vld [vmem:[#allocation5 + $0x10] sm:$0xff]
    %v146 = vld [vmem:[#allocation5 + $0x18] sm:$0xff]
    %v147 = vld [vmem:[#allocation5 + $0x20] sm:$0xff]
    %v148 = vld [vmem:[#allocation5 + $0x28] sm:$0xff]
    %v149 = vld [vmem:[#allocation5 + $0x30] sm:$0xff]
    %v150 = vld [vmem:[#allocation5 + $0x38] sm:$0x1]
    %v151 = vld [vmem:[#allocation7] sm:$0xff]
    %v152 = vld [vmem:[#allocation7 + $0x8] sm:$0xff]
    %v153 = vld [vmem:[#allocation7 + $0x10] sm:$0xff]
    %v154 = vld [vmem:[#allocation7 + $0x18] sm:$0xff]
    %v155 = vld [vmem:[#allocation7 + $0x20] sm:$0xff]
    %v156 = vld [vmem:[#allocation7 + $0x28] sm:$0xff]
    %v157 = vld [vmem:[#allocation7 + $0x30] sm:$0xff]
    %v158 = vld [vmem:[#allocation7 + $0x38] sm:$0xff]
    %v159 = vld [vmem:[#allocation7 + $0x40] sm:$0xff]
    %v160 = vld [vmem:[#allocation7 + $0x48] sm:$0xff]
    %v161 = vld [vmem:[#allocation7 + $0x50] sm:$0xff]
    %v162 = vld [vmem:[#allocation7 + $0x58] sm:$0xff]
    %v163 = vld [vmem:[#allocation7 + $0x60] sm:$0xff]
    %v164 = vld [vmem:[#allocation7 + $0x68] sm:$0xff]
    %v165 = vld [vmem:[#allocation7 + $0x70] sm:$0xff]
    %v166 = vld [vmem:[#allocation7 + $0x78] sm:$0xff]
    %v167 = vld [vmem:[#allocation8] sm:$0x1]
    %v168 = vld [vmem:[#allocation10] sm:$0xff]
    %v169 = vld [vmem:[#allocation10 + $0x8] sm:$0xff]
    %v170 = vld [vmem:[#allocation10 + $0x10] sm:$0xff]
    %v171 = vld [vmem:[#allocation10 + $0x18] sm:$0xff]
    %v172 = vld [vmem:[#allocation11] sm:$0x1]
    %v173 = vld [vmem:[#allocation13] sm:$0xff]
    %v174 = vld [vmem:[#allocation13 + $0x8] sm:$0xff]
    %v175 = vld [vmem:[#allocation13 + $0x10] sm:$0xff]
    %v176 = vld [vmem:[#allocation13 + $0x18] sm:$0xff]
    %v177 = vld [vmem:[%s9] sm:$0x1]
    %v178 = vld [vmem:[#allocation2] sm:$0xff]
    %v180 = vperm.slane %v167, 0
    %vm182 = vcmask 465920
    %v184 = vsel %vm182, %v178, 0
    %vm186 = vcmask 1040384
    %v188 = vsel %vm186, %v150, 0
    %190 = vmatpush.msra.mxu0 0.0
    %191 = vmatpush.msra.mxu0 0.0
    %192 = vmatpush.msra.mxu0 0.0
    %193 = vmatpush.msra.mxu0 0.0
    %194 = vmatpush.msra.mxu0 0.0
    %195 = vmatpush.msra.mxu0 0.0
    %196 = vmatpush.msra.mxu0 0.0
    %197 = vmatpush.msra.mxu0 0.0
    %198 = vmatpush.msra.mxu0 %v188
    %199 = vmatpush.msra.mxu0 %v149
    %200 = vmatpush.msra.mxu0 %v148
    %201 = vmatpush.msra.mxu0 %v147
    %202 = vmatpush.msra.mxu0 %v146
    %203 = vmatpush.msra.mxu0 %v145
    %204 = vmatpush.msra.mxu0 %v144
    %205 = vmatpush.msra.mxu0 %v143
    %206 = vmatmul.f32.gmra.mxu0 %v184
    %v207 = vpop.f32.mrf.mxu0
    %v208 = vadd.f32 %v180, %v207
    %209 = vdwg.mxu0
    %v210 = vld [vmem:[%s6] sm:$0x1]
    %v211 = vld [vmem:[%s6 + $0x1] sm:$0x1]
    %v212 = vld [vmem:[%s7] sm:$0x1]
    %v213 = vld [vmem:[%s7 + $0x1] sm:$0x1]
    %215 = vrot.lane.b32.xlu0 %v211, 32
    %v216 = vpop.permute.xlu0 %215
    %vm218 = vcmask 261120
    %v219 = vsel %vm218, %v210, %v216
    %vm220 = vcmask 523264
    %v222 = vsel %vm220, %v219, 0
    %224 = vmatpush.msra.mxu0 0.0
    %225 = vmatpush.msra.mxu0 0.0
    %226 = vmatpush.msra.mxu0 0.0
    %227 = vmatpush.msra.mxu0 0.0
    %228 = vmatpush.msra.mxu0 0.0
    %229 = vmatpush.msra.mxu0 0.0
    %230 = vmatpush.msra.mxu0 0.0
    %231 = vmatpush.msra.mxu0 0.0
    %232 = vmatpush.msra.mxu0 %v165
    %233 = vmatpush.msra.mxu0 %v163
    %234 = vmatpush.msra.mxu0 %v161
    %235 = vmatpush.msra.mxu0 %v159
    %236 = vmatpush.msra.mxu0 %v157
    %237 = vmatpush.msra.mxu0 %v155
    %238 = vmatpush.msra.mxu0 %v153
    %239 = vmatpush.msra.mxu0 %v151
    %240 = vmatmul.f32.gmra.mxu0 %v222
    %v241 = vpop.f32.mrf.mxu0
    %v242 = vadd.f32 0.0, %v241
    %243 = vdwg.mxu0
    %244 = vmatpush.msra.mxu0 0.0
    %245 = vmatpush.msra.mxu0 0.0
    %246 = vmatpush.msra.mxu0 0.0
    %247 = vmatpush.msra.mxu0 0.0
    %248 = vmatpush.msra.mxu0 0.0
    %249 = vmatpush.msra.mxu0 0.0
    %250 = vmatpush.msra.mxu0 0.0
    %251 = vmatpush.msra.mxu0 0.0
    %252 = vmatpush.msra.mxu0 %v166
    %253 = vmatpush.msra.mxu0 %v164
    %254 = vmatpush.msra.mxu0 %v162
    %255 = vmatpush.msra.mxu0 %v160
    %256 = vmatpush.msra.mxu0 %v158
    %257 = vmatpush.msra.mxu0 %v156
    %258 = vmatpush.msra.mxu0 %v154
    %259 = vmatpush.msra.mxu0 %v152
    %260 = vmatmul.f32.gmra.mxu0 %v222
    %v261 = vpop.f32.mrf.mxu0
    %v262 = vadd.f32 0.0, %v261
    %263 = vdwg.mxu0
    %v264 = vadd.f32 %v208, %v242
    %v265 = vxor.u32 %v264, 2147483648
    %v266 = vmul.f32 %v265, 1.442695
    %v267 = vpow.pop %v266
    %v268 = vadd.f32 %v267, 1.0
    %v269 = vrcp.pop %v268
    %v270 = vmul.f32 %v268, %v269
    %v271 = vsub.f32 1.0, %v270
    %v272 = vmul.f32 %v269, %v271
    %v273 = vadd.f32 %v269, %v272
    %vm274 = vweird.f32 %v268
    %vm275 = vweird.f32 %v269
    %vm276 = vmor %vm274, %vm275
    %v277 = vsel %vm276, %v269, %v273
    %v278 = vand.u32 2147483647, %v268
    %vm279 = vcmp.eq.f32.partialorder %v278, 8.507059e+37
    %v280 = vand.u32 %v268, 2147483648
    %v281 = vor.u32 1.1754944e-38, %v280
    %v282 = vsel %vm279, %v281, %v277
    %v283 = vmul.f32 1.0, %v282
    %v284 = vtanh.pop %v264
    %286 = vrot.lane.b32.xlu0 %v212, 32
    %v287 = vpop.permute.xlu0 %286
    %v289 = vmul.f32 %v283, %v287
    %291 = vrot.lane.b32.xlu0 %v284, 64
    %v292 = vpop.permute.xlu0 %291
    %v294 = vmul.f32 %v283, %v292
    %296 = vrot.lane.b32.xlu0 %v294, 32
    %v297 = vpop.permute.xlu0 %296
    %v299 = vadd.f32 %v289, %v297
    %v300 = vtanh.pop %v299
    %302 = vrot.lane.b32.xlu0 %v300, 64
    %v303 = vpop.permute.xlu0 %302
    %v305 = vmul.f32 %v283, %v303
    %307 = vrot.lane.b32.xlu0 %v305, 32
    %v308 = vpop.permute.xlu0 %307
    %v309 = vsel %vm218, %v308, 0
    %311 = vmatpush.msra.mxu0 0.0
    %312 = vmatpush.msra.mxu0 0.0
    %313 = vmatpush.msra.mxu0 0.0
    %314 = vmatpush.msra.mxu0 0.0
    %315 = vmatpush.msra.mxu0 0.0
    %316 = vmatpush.msra.mxu0 0.0
    %317 = vmatpush.msra.mxu0 0.0
    %318 = vmatpush.msra.mxu0 0.0
    %319 = vmatpush.msra.mxu0 0.0
    %320 = vmatpush.msra.mxu0 0.0
    %321 = vmatpush.msra.mxu0 0.0
    %322 = vmatpush.msra.mxu0 0.0
    %323 = vmatpush.msra.mxu0 %v171
    %324 = vmatpush.msra.mxu0 %v170
    %325 = vmatpush.msra.mxu0 %v169
    %326 = vmatpush.msra.mxu0 %v168
    %327 = vmatmul.f32.gmra.mxu0 %v309
    %v328 = vpop.f32.mrf.mxu0
    %v329 = vadd.f32 %v172, %v328
    %330 = vdwg.mxu0
    %v331 = vadd.f32 %v329, %v262
    %v332 = vxor.u32 %v331, 2147483648
    %v333 = vmul.f32 %v332, 1.442695
    %v334 = vpow.pop %v333
    %v335 = vadd.f32 %v334, 1.0
    %v336 = vrcp.pop %v335
    %v337 = vmul.f32 %v335, %v336
    %v338 = vsub.f32 1.0, %v337
    %v339 = vmul.f32 %v336, %v338
    %v340 = vadd.f32 %v336, %v339
    %vm341 = vweird.f32 %v335
    %vm342 = vweird.f32 %v336
    %vm343 = vmor %vm341, %vm342
    %v344 = vsel %vm343, %v336, %v340
    %v345 = vand.u32 2147483647, %v335
    %vm346 = vcmp.eq.f32.partialorder %v345, 8.507059e+37
    %v347 = vand.u32 %v335, 2147483648
    %v348 = vor.u32 1.1754944e-38, %v347
    %v349 = vsel %vm346, %v348, %v344
    %v350 = vmul.f32 1.0, %v349
    %v351 = vtanh.pop %v331
    %353 = vrot.lane.b32.xlu0 %v213, 32
    %v354 = vpop.permute.xlu0 %353
    %v356 = vmul.f32 %v350, %v354
    %358 = vrot.lane.b32.xlu0 %v351, 64
    %v359 = vpop.permute.xlu0 %358
    %v361 = vmul.f32 %v350, %v359
    %363 = vrot.lane.b32.xlu0 %v361, 32
    %v364 = vpop.permute.xlu0 %363
    %v366 = vadd.f32 %v356, %v364
    %v367 = vtanh.pop %v366
    %369 = vrot.lane.b32.xlu0 %v367, 64
    %v370 = vpop.permute.xlu0 %369
    %v372 = vmul.f32 %v350, %v370
    %375 = vrot.lane.b32.xlu0 %v372, 64
    %v376 = vpop.permute.xlu0 %375
    %v378 = vsel %vm218, %v308, %v376
    %v380 = vsel %vm220, %v378, 0
    %382 = vmatpush.msra.mxu0 0.0
    %383 = vmatpush.msra.mxu0 0.0
    %384 = vmatpush.msra.mxu0 0.0
    %385 = vmatpush.msra.mxu0 0.0
    %386 = vmatpush.msra.mxu0 0.0
    %387 = vmatpush.msra.mxu0 0.0
    %388 = vmatpush.msra.mxu0 0.0
    %389 = vmatpush.msra.mxu0 0.0
    %390 = vmatpush.msra.mxu0 %v165
    %391 = vmatpush.msra.mxu0 %v163
    %392 = vmatpush.msra.mxu0 %v161
    %393 = vmatpush.msra.mxu0 %v159
    %394 = vmatpush.msra.mxu0 %v157
    %395 = vmatpush.msra.mxu0 %v155
    %396 = vmatpush.msra.mxu0 %v153
    %397 = vmatpush.msra.mxu0 %v151
    %398 = vmatmul.f32.gmra.mxu0 %v380
    %v399 = vpop.f32.mrf.mxu0
    %v400 = vadd.f32 0.0, %v399
    %401 = vdwg.mxu0
    %402 = vmatpush.msra.mxu0 0.0
    %403 = vmatpush.msra.mxu0 0.0
    %404 = vmatpush.msra.mxu0 0.0
    %405 = vmatpush.msra.mxu0 0.0
    %406 = vmatpush.msra.mxu0 0.0
    %407 = vmatpush.msra.mxu0 0.0
    %408 = vmatpush.msra.mxu0 0.0
    %409 = vmatpush.msra.mxu0 0.0
    %410 = vmatpush.msra.mxu0 %v166
    %411 = vmatpush.msra.mxu0 %v164
    %412 = vmatpush.msra.mxu0 %v162
    %413 = vmatpush.msra.mxu0 %v160
    %414 = vmatpush.msra.mxu0 %v158
    %415 = vmatpush.msra.mxu0 %v156
    %416 = vmatpush.msra.mxu0 %v154
    %417 = vmatpush.msra.mxu0 %v152
    %418 = vmatmul.f32.gmra.mxu0 %v380
    %v419 = vpop.f32.mrf.mxu0
    %v420 = vadd.f32 0.0, %v419
    %421 = vdwg.mxu0
    %v423 = vrot.slane %v400, 7
    %v425 = vadd.f32 %v208, %v423
    %v426 = vxor.u32 %v425, 2147483648
    %v427 = vmul.f32 %v426, 1.442695
    %v428 = vpow.pop %v427
    %v429 = vadd.f32 %v428, 1.0
    %v430 = vrcp.pop %v429
    %v431 = vmul.f32 %v429, %v430
    %v432 = vsub.f32 1.0, %v431
    %v433 = vmul.f32 %v430, %v432
    %v434 = vadd.f32 %v430, %v433
    %vm435 = vweird.f32 %v429
    %vm436 = vweird.f32 %v430
    %vm437 = vmor %vm435, %vm436
    %v438 = vsel %vm437, %v430, %v434
    %v439 = vand.u32 2147483647, %v429
    %vm440 = vcmp.eq.f32.partialorder %v439, 8.507059e+37
    %v441 = vand.u32 %v429, 2147483648
    %v442 = vor.u32 1.1754944e-38, %v441
    %v443 = vsel %vm440, %v442, %v438
    %v444 = vmul.f32 1.0, %v443
    %v445 = vtanh.pop %v425
    %v447 = vrot.slane %v299, 7
    %v449 = vmul.f32 %v444, %v447
    %451 = vrot.lane.b32.xlu0 %v445, 64
    %v452 = vpop.permute.xlu0 %451
    %v454 = vmul.f32 %v444, %v452
    %456 = vrot.lane.b32.xlu0 %v454, 32
    %v457 = vpop.permute.xlu0 %456
    %v459 = vadd.f32 %v449, %v457
    %v460 = vtanh.pop %v459
    %462 = vrot.lane.b32.xlu0 %v460, 64
    %v463 = vpop.permute.xlu0 %462
    %v465 = vmul.f32 %v444, %v463
    %v467 = vrot.slane %v465, 1
    %468 = vrot.lane.b32.xlu0 %v467, 32
    %v469 = vpop.permute.xlu0 %468
    %v470 = vsel %vm218, %v469, 0
    %472 = vmatpush.msra.mxu0 0.0
    %473 = vmatpush.msra.mxu0 0.0
    %474 = vmatpush.msra.mxu0 0.0
    %475 = vmatpush.msra.mxu0 0.0
    %476 = vmatpush.msra.mxu0 0.0
    %477 = vmatpush.msra.mxu0 0.0
    %478 = vmatpush.msra.mxu0 0.0
    %479 = vmatpush.msra.mxu0 0.0
    %480 = vmatpush.msra.mxu0 0.0
    %481 = vmatpush.msra.mxu0 0.0
    %482 = vmatpush.msra.mxu0 0.0
    %483 = vmatpush.msra.mxu0 0.0
    %484 = vmatpush.msra.mxu0 %v171
    %485 = vmatpush.msra.mxu0 %v170
    %486 = vmatpush.msra.mxu0 %v169
    %487 = vmatpush.msra.mxu0 %v168
    %488 = vmatmul.f32.gmra.mxu0 %v470
    %v489 = vpop.f32.mrf.mxu0
    %v490 = vadd.f32 %v172, %v489
    %491 = vdwg.mxu0
    %v492 = vadd.f32 %v490, %v420
    %v493 = vxor.u32 %v492, 2147483648
    %v494 = vmul.f32 %v493, 1.442695
    %v495 = vpow.pop %v494
    %v496 = vadd.f32 %v495, 1.0
    %v497 = vrcp.pop %v496
    %v498 = vmul.f32 %v496, %v497
    %v499 = vsub.f32 1.0, %v498
    %v500 = vmul.f32 %v497, %v499
    %v501 = vadd.f32 %v497, %v500
    %vm502 = vweird.f32 %v496
    %vm503 = vweird.f32 %v497
    %vm504 = vmor %vm502, %vm503
    %v505 = vsel %vm504, %v497, %v501
    %v506 = vand.u32 2147483647, %v496
    %vm507 = vcmp.eq.f32.partialorder %v506, 8.507059e+37
    %v508 = vand.u32 %v496, 2147483648
    %v509 = vor.u32 1.1754944e-38, %v508
    %v510 = vsel %vm507, %v509, %v505
    %v511 = vmul.f32 1.0, %v510
    %v512 = vtanh.pop %v492
    %v513 = vmul.f32 %v511, %v366
    %515 = vrot.lane.b32.xlu0 %v512, 64
    %v516 = vpop.permute.xlu0 %515
    %v518 = vmul.f32 %v511, %v516
    %520 = vrot.lane.b32.xlu0 %v518, 32
    %v521 = vpop.permute.xlu0 %520
    %v523 = vadd.f32 %v513, %v521
    %v524 = vtanh.pop %v523
    %526 = vrot.lane.b32.xlu0 %v524, 64
    %v527 = vpop.permute.xlu0 %526
    %v529 = vmul.f32 %v511, %v527
    %530 = vrot.lane.b32.xlu0 %v465, 32
    %v531 = vpop.permute.xlu0 %530
    %v534 = vrot.slane %v529, 7
    %535 = vrot.lane.b32.xlu0 %v534, 64
    %v536 = vpop.permute.xlu0 %535
    %v538 = vsel %vm218, %v531, %v536
    %v540 = vrot.slane %v538, 1
    %v541 = vsel %vm220, %v540, 0
    %543 = vmatpush.msra.mxu0 0.0
    %544 = vmatpush.msra.mxu0 0.0
    %545 = vmatpush.msra.mxu0 0.0
    %546 = vmatpush.msra.mxu0 0.0
    %547 = vmatpush.msra.mxu0 0.0
    %548 = vmatpush.msra.mxu0 0.0
    %549 = vmatpush.msra.mxu0 0.0
    %550 = vmatpush.msra.mxu0 0.0
    %551 = vmatpush.msra.mxu0 %v165
    %552 = vmatpush.msra.mxu0 %v163
    %553 = vmatpush.msra.mxu0 %v161
    %554 = vmatpush.msra.mxu0 %v159
    %555 = vmatpush.msra.mxu0 %v157
    %556 = vmatpush.msra.mxu0 %v155
    %557 = vmatpush.msra.mxu0 %v153
    %558 = vmatpush.msra.mxu0 %v151
    %559 = vmatmul.f32.gmra.mxu0 %v541
    %v560 = vpop.f32.mrf.mxu0
    %v561 = vadd.f32 0.0, %v560
    %562 = vdwg.mxu0
    %563 = vmatpush.msra.mxu0 0.0
    %564 = vmatpush.msra.mxu0 0.0
    %565 = vmatpush.msra.mxu0 0.0
    %566 = vmatpush.msra.mxu0 0.0
    %567 = vmatpush.msra.mxu0 0.0
    %568 = vmatpush.msra.mxu0 0.0
    %569 = vmatpush.msra.mxu0 0.0
    %570 = vmatpush.msra.mxu0 0.0
    %571 = vmatpush.msra.mxu0 %v166
    %572 = vmatpush.msra.mxu0 %v164
    %573 = vmatpush.msra.mxu0 %v162
    %574 = vmatpush.msra.mxu0 %v160
    %575 = vmatpush.msra.mxu0 %v158
    %576 = vmatpush.msra.mxu0 %v156
    %577 = vmatpush.msra.mxu0 %v154
    %578 = vmatpush.msra.mxu0 %v152
    %579 = vmatmul.f32.gmra.mxu0 %v541
    %v580 = vpop.f32.mrf.mxu0
    %v581 = vadd.f32 0.0, %v580
    %582 = vdwg.mxu0
    %v584 = vrot.slane %v561, 6
    %v586 = vadd.f32 %v208, %v584
    %v587 = vxor.u32 %v586, 2147483648
    %v588 = vmul.f32 %v587, 1.442695
    %v589 = vpow.pop %v588
    %v590 = vadd.f32 %v589, 1.0
    %v591 = vrcp.pop %v590
    %v592 = vmul.f32 %v590, %v591
    %v593 = vsub.f32 1.0, %v592
    %v594 = vmul.f32 %v591, %v593
    %v595 = vadd.f32 %v591, %v594
    %vm596 = vweird.f32 %v590
    %vm597 = vweird.f32 %v591
    %vm598 = vmor %vm596, %vm597
    %v599 = vsel %vm598, %v591, %v595
    %v600 = vand.u32 2147483647, %v590
    %vm601 = vcmp.eq.f32.partialorder %v600, 8.507059e+37
    %v602 = vand.u32 %v590, 2147483648
    %v603 = vor.u32 1.1754944e-38, %v602
    %v604 = vsel %vm601, %v603, %v599
    %v605 = vmul.f32 1.0, %v604
    %v606 = vtanh.pop %v586
    %v608 = vrot.slane %v459, 7
    %v610 = vmul.f32 %v605, %v608
    %612 = vrot.lane.b32.xlu0 %v606, 64
    %v613 = vpop.permute.xlu0 %612
    %v615 = vmul.f32 %v605, %v613
    %617 = vrot.lane.b32.xlu0 %v615, 32
    %v618 = vpop.permute.xlu0 %617
    %v620 = vadd.f32 %v610, %v618
    %v621 = vtanh.pop %v620
    %623 = vrot.lane.b32.xlu0 %v621, 64
    %v624 = vpop.permute.xlu0 %623
    %v626 = vmul.f32 %v605, %v624
    %v628 = vrot.slane %v626, 2
    %629 = vrot.lane.b32.xlu0 %v628, 32
    %v630 = vpop.permute.xlu0 %629
    %v631 = vsel %vm218, %v630, 0
    %633 = vmatpush.msra.mxu0 0.0
    %634 = vmatpush.msra.mxu0 0.0
    %635 = vmatpush.msra.mxu0 0.0
    %636 = vmatpush.msra.mxu0 0.0
    %637 = vmatpush.msra.mxu0 0.0
    %638 = vmatpush.msra.mxu0 0.0
    %639 = vmatpush.msra.mxu0 0.0
    %640 = vmatpush.msra.mxu0 0.0
    %641 = vmatpush.msra.mxu0 0.0
    %642 = vmatpush.msra.mxu0 0.0
    %643 = vmatpush.msra.mxu0 0.0
    %644 = vmatpush.msra.mxu0 0.0
    %645 = vmatpush.msra.mxu0 %v171
    %646 = vmatpush.msra.mxu0 %v170
    %647 = vmatpush.msra.mxu0 %v169
    %648 = vmatpush.msra.mxu0 %v168
    %649 = vmatmul.f32.gmra.mxu0 %v631
    %v650 = vpop.f32.mrf.mxu0
    %v651 = vadd.f32 %v172, %v650
    %652 = vdwg.mxu0
    %v653 = vadd.f32 %v651, %v581
    %v654 = vxor.u32 %v653, 2147483648
    %v655 = vmul.f32 %v654, 1.442695
    %v656 = vpow.pop %v655
    %v657 = vadd.f32 %v656, 1.0
    %v658 = vrcp.pop %v657
    %v659 = vmul.f32 %v657, %v658
    %v660 = vsub.f32 1.0, %v659
    %v661 = vmul.f32 %v658, %v660
    %v662 = vadd.f32 %v658, %v661
    %vm663 = vweird.f32 %v657
    %vm664 = vweird.f32 %v658
    %vm665 = vmor %vm663, %vm664
    %v666 = vsel %vm665, %v658, %v662
    %v667 = vand.u32 2147483647, %v657
    %vm668 = vcmp.eq.f32.partialorder %v667, 8.507059e+37
    %v669 = vand.u32 %v657, 2147483648
    %v670 = vor.u32 1.1754944e-38, %v669
    %v671 = vsel %vm668, %v670, %v666
    %v672 = vmul.f32 1.0, %v671
    %v673 = vtanh.pop %v653
    %v674 = vmul.f32 %v672, %v523
    %676 = vrot.lane.b32.xlu0 %v673, 64
    %v677 = vpop.permute.xlu0 %676
    %v679 = vmul.f32 %v672, %v677
    %681 = vrot.lane.b32.xlu0 %v679, 32
    %v682 = vpop.permute.xlu0 %681
    %v684 = vadd.f32 %v674, %v682
    %v685 = vtanh.pop %v684
    %687 = vrot.lane.b32.xlu0 %v685, 64
    %v688 = vpop.permute.xlu0 %687
    %v690 = vmul.f32 %v672, %v688
    %691 = vrot.lane.b32.xlu0 %v626, 32
    %v692 = vpop.permute.xlu0 %691
    %v695 = vrot.slane %v690, 6
    %696 = vrot.lane.b32.xlu0 %v695, 64
    %v697 = vpop.permute.xlu0 %696
    %v699 = vsel %vm218, %v692, %v697
    %v701 = vrot.slane %v699, 2
    %v702 = vsel %vm220, %v701, 0
    %704 = vmatpush.msra.mxu0 0.0
    %705 = vmatpush.msra.mxu0 0.0
    %706 = vmatpush.msra.mxu0 0.0
    %707 = vmatpush.msra.mxu0 0.0
    %708 = vmatpush.msra.mxu0 0.0
    %709 = vmatpush.msra.mxu0 0.0
    %710 = vmatpush.msra.mxu0 0.0
    %711 = vmatpush.msra.mxu0 0.0
    %712 = vmatpush.msra.mxu0 %v165
    %713 = vmatpush.msra.mxu0 %v163
    %714 = vmatpush.msra.mxu0 %v161
    %715 = vmatpush.msra.mxu0 %v159
    %716 = vmatpush.msra.mxu0 %v157
    %717 = vmatpush.msra.mxu0 %v155
    %718 = vmatpush.msra.mxu0 %v153
    %719 = vmatpush.msra.mxu0 %v151
    %720 = vmatmul.f32.gmra.mxu0 %v702
    %v721 = vpop.f32.mrf.mxu0
    %v722 = vadd.f32 0.0, %v721
    %723 = vdwg.mxu0
    %724 = vmatpush.msra.mxu0 0.0
    %725 = vmatpush.msra.mxu0 0.0
    %726 = vmatpush.msra.mxu0 0.0
    %727 = vmatpush.msra.mxu0 0.0
    %728 = vmatpush.msra.mxu0 0.0
    %729 = vmatpush.msra.mxu0 0.0
    %730 = vmatpush.msra.mxu0 0.0
    %731 = vmatpush.msra.mxu0 0.0
    %732 = vmatpush.msra.mxu0 %v166
    %733 = vmatpush.msra.mxu0 %v164
    %734 = vmatpush.msra.mxu0 %v162
    %735 = vmatpush.msra.mxu0 %v160
    %736 = vmatpush.msra.mxu0 %v158
    %737 = vmatpush.msra.mxu0 %v156
    %738 = vmatpush.msra.mxu0 %v154
    %739 = vmatpush.msra.mxu0 %v152
    %740 = vmatmul.f32.gmra.mxu0 %v702
    %v741 = vpop.f32.mrf.mxu0
    %v742 = vadd.f32 0.0, %v741
    %743 = vdwg.mxu0
    %v745 = vrot.slane %v722, 5
    %v747 = vadd.f32 %v208, %v745
    %v748 = vxor.u32 %v747, 2147483648
    %v749 = vmul.f32 %v748, 1.442695
    %v750 = vpow.pop %v749
    %v751 = vadd.f32 %v750, 1.0
    %v752 = vrcp.pop %v751
    %v753 = vmul.f32 %v751, %v752
    %v754 = vsub.f32 1.0, %v753
    %v755 = vmul.f32 %v752, %v754
    %v756 = vadd.f32 %v752, %v755
    %vm757 = vweird.f32 %v751
    %vm758 = vweird.f32 %v752
    %vm759 = vmor %vm757, %vm758
    %v760 = vsel %vm759, %v752, %v756
    %v761 = vand.u32 2147483647, %v751
    %vm762 = vcmp.eq.f32.partialorder %v761, 8.507059e+37
    %v763 = vand.u32 %v751, 2147483648
    %v764 = vor.u32 1.1754944e-38, %v763
    %v765 = vsel %vm762, %v764, %v760
    %v766 = vmul.f32 1.0, %v765
    %v767 = vtanh.pop %v747
    %v769 = vrot.slane %v620, 7
    %v771 = vmul.f32 %v766, %v769
    %773 = vrot.lane.b32.xlu0 %v767, 64
    %v774 = vpop.permute.xlu0 %773
    %v776 = vmul.f32 %v766, %v774
    %778 = vrot.lane.b32.xlu0 %v776, 32
    %v779 = vpop.permute.xlu0 %778
    %v781 = vadd.f32 %v771, %v779
    %v782 = vtanh.pop %v781
    %784 = vrot.lane.b32.xlu0 %v782, 64
    %v785 = vpop.permute.xlu0 %784
    %v787 = vmul.f32 %v766, %v785
    %v789 = vrot.slane %v787, 3
    %790 = vrot.lane.b32.xlu0 %v789, 32
    %v791 = vpop.permute.xlu0 %790
    %v792 = vsel %vm218, %v791, 0
    %794 = vmatpush.msra.mxu0 0.0
    %795 = vmatpush.msra.mxu0 0.0
    %796 = vmatpush.msra.mxu0 0.0
    %797 = vmatpush.msra.mxu0 0.0
    %798 = vmatpush.msra.mxu0 0.0
    %799 = vmatpush.msra.mxu0 0.0
    %800 = vmatpush.msra.mxu0 0.0
    %801 = vmatpush.msra.mxu0 0.0
    %802 = vmatpush.msra.mxu0 0.0
    %803 = vmatpush.msra.mxu0 0.0
    %804 = vmatpush.msra.mxu0 0.0
    %805 = vmatpush.msra.mxu0 0.0
    %806 = vmatpush.msra.mxu0 %v171
    %807 = vmatpush.msra.mxu0 %v170
    %808 = vmatpush.msra.mxu0 %v169
    %809 = vmatpush.msra.mxu0 %v168
    %810 = vmatmul.f32.gmra.mxu0 %v792
    %v811 = vpop.f32.mrf.mxu0
    %v812 = vadd.f32 %v172, %v811
    %813 = vdwg.mxu0
    %v814 = vadd.f32 %v812, %v742
    %v815 = vxor.u32 %v814, 2147483648
    %v816 = vmul.f32 %v815, 1.442695
    %v817 = vpow.pop %v816
    %v818 = vadd.f32 %v817, 1.0
    %v819 = vrcp.pop %v818
    %v820 = vmul.f32 %v818, %v819
    %v821 = vsub.f32 1.0, %v820
    %v822 = vmul.f32 %v819, %v821
    %v823 = vadd.f32 %v819, %v822
    %vm824 = vweird.f32 %v818
    %vm825 = vweird.f32 %v819
    %vm826 = vmor %vm824, %vm825
    %v827 = vsel %vm826, %v819, %v823
    %v828 = vand.u32 2147483647, %v818
    %vm829 = vcmp.eq.f32.partialorder %v828, 8.507059e+37
    %v830 = vand.u32 %v818, 2147483648
    %v831 = vor.u32 1.1754944e-38, %v830
    %v832 = vsel %vm829, %v831, %v827
    %v833 = vmul.f32 1.0, %v832
    %v834 = vtanh.pop %v814
    %v835 = vmul.f32 %v833, %v684
    %837 = vrot.lane.b32.xlu0 %v834, 64
    %v838 = vpop.permute.xlu0 %837
    %v840 = vmul.f32 %v833, %v838
    %842 = vrot.lane.b32.xlu0 %v840, 32
    %v843 = vpop.permute.xlu0 %842
    %v845 = vadd.f32 %v835, %v843
    %v846 = vtanh.pop %v845
    %848 = vrot.lane.b32.xlu0 %v846, 64
    %v849 = vpop.permute.xlu0 %848
    %v851 = vmul.f32 %v833, %v849
    %852 = vrot.lane.b32.xlu0 %v787, 32
    %v853 = vpop.permute.xlu0 %852
    %v856 = vrot.slane %v851, 5
    %857 = vrot.lane.b32.xlu0 %v856, 64
    %v858 = vpop.permute.xlu0 %857
    %v860 = vsel %vm218, %v853, %v858
    %v862 = vrot.slane %v860, 3
    %v863 = vsel %vm220, %v862, 0
    %865 = vmatpush.msra.mxu0 0.0
    %866 = vmatpush.msra.mxu0 0.0
    %867 = vmatpush.msra.mxu0 0.0
    %868 = vmatpush.msra.mxu0 0.0
    %869 = vmatpush.msra.mxu0 0.0
    %870 = vmatpush.msra.mxu0 0.0
    %871 = vmatpush.msra.mxu0 0.0
    %872 = vmatpush.msra.mxu0 0.0
    %873 = vmatpush.msra.mxu0 %v165
    %874 = vmatpush.msra.mxu0 %v163
    %875 = vmatpush.msra.mxu0 %v161
    %876 = vmatpush.msra.mxu0 %v159
    %877 = vmatpush.msra.mxu0 %v157
    %878 = vmatpush.msra.mxu0 %v155
    %879 = vmatpush.msra.mxu0 %v153
    %880 = vmatpush.msra.mxu0 %v151
    %881 = vmatmul.f32.gmra.mxu0 %v863
    %v882 = vpop.f32.mrf.mxu0
    %v883 = vadd.f32 0.0, %v882
    %884 = vdwg.mxu0
    %885 = vmatpush.msra.mxu0 0.0
    %886 = vmatpush.msra.mxu0 0.0
    %887 = vmatpush.msra.mxu0 0.0
    %888 = vmatpush.msra.mxu0 0.0
    %889 = vmatpush.msra.mxu0 0.0
    %890 = vmatpush.msra.mxu0 0.0
    %891 = vmatpush.msra.mxu0 0.0
    %892 = vmatpush.msra.mxu0 0.0
    %893 = vmatpush.msra.mxu0 %v166
    %894 = vmatpush.msra.mxu0 %v164
    %895 = vmatpush.msra.mxu0 %v162
    %896 = vmatpush.msra.mxu0 %v160
    %897 = vmatpush.msra.mxu0 %v158
    %898 = vmatpush.msra.mxu0 %v156
    %899 = vmatpush.msra.mxu0 %v154
    %900 = vmatpush.msra.mxu0 %v152
    %901 = vmatmul.f32.gmra.mxu0 %v863
    %v902 = vpop.f32.mrf.mxu0
    %v903 = vadd.f32 0.0, %v902
    %904 = vdwg.mxu0
    %v906 = vrot.slane %v883, 4
    %v908 = vadd.f32 %v208, %v906
    %v909 = vxor.u32 %v908, 2147483648
    %v910 = vmul.f32 %v909, 1.442695
    %v911 = vpow.pop %v910
    %v912 = vadd.f32 %v911, 1.0
    %v913 = vrcp.pop %v912
    %v914 = vmul.f32 %v912, %v913
    %v915 = vsub.f32 1.0, %v914
    %v916 = vmul.f32 %v913, %v915
    %v917 = vadd.f32 %v913, %v916
    %vm918 = vweird.f32 %v912
    %vm919 = vweird.f32 %v913
    %vm920 = vmor %vm918, %vm919
    %v921 = vsel %vm920, %v913, %v917
    %v922 = vand.u32 2147483647, %v912
    %vm923 = vcmp.eq.f32.partialorder %v922, 8.507059e+37
    %v924 = vand.u32 %v912, 2147483648
    %v925 = vor.u32 1.1754944e-38, %v924
    %v926 = vsel %vm923, %v925, %v921
    %v927 = vmul.f32 1.0, %v926
    %v928 = vtanh.pop %v908
    %v930 = vrot.slane %v781, 7
    %v932 = vmul.f32 %v927, %v930
    %934 = vrot.lane.b32.xlu0 %v928, 64
    %v935 = vpop.permute.xlu0 %934
    %v937 = vmul.f32 %v927, %v935
    %939 = vrot.lane.b32.xlu0 %v937, 32
    %v940 = vpop.permute.xlu0 %939
    %v942 = vadd.f32 %v932, %v940
    %v943 = vtanh.pop %v942
    %945 = vrot.lane.b32.xlu0 %v943, 64
    %v946 = vpop.permute.xlu0 %945
    %v948 = vmul.f32 %v927, %v946
    %v950 = vrot.slane %v948, 4
    %951 = vrot.lane.b32.xlu0 %v950, 32
    %v952 = vpop.permute.xlu0 %951
    %v953 = vsel %vm218, %v952, 0
    %955 = vmatpush.msra.mxu0 0.0
    %956 = vmatpush.msra.mxu0 0.0
    %957 = vmatpush.msra.mxu0 0.0
    %958 = vmatpush.msra.mxu0 0.0
    %959 = vmatpush.msra.mxu0 0.0
    %960 = vmatpush.msra.mxu0 0.0
    %961 = vmatpush.msra.mxu0 0.0
    %962 = vmatpush.msra.mxu0 0.0
    %963 = vmatpush.msra.mxu0 0.0
    %964 = vmatpush.msra.mxu0 0.0
    %965 = vmatpush.msra.mxu0 0.0
    %966 = vmatpush.msra.mxu0 0.0
    %967 = vmatpush.msra.mxu0 %v171
    %968 = vmatpush.msra.mxu0 %v170
    %969 = vmatpush.msra.mxu0 %v169
    %970 = vmatpush.msra.mxu0 %v168
    %971 = vmatmul.f32.gmra.mxu0 %v953
    %v972 = vpop.f32.mrf.mxu0
    %v973 = vadd.f32 %v172, %v972
    %974 = vdwg.mxu0
    %v975 = vadd.f32 %v973, %v903
    %v976 = vxor.u32 %v975, 2147483648
    %v977 = vmul.f32 %v976, 1.442695
    %v978 = vpow.pop %v977
    %v979 = vadd.f32 %v978, 1.0
    %v980 = vrcp.pop %v979
    %v981 = vmul.f32 %v979, %v980
    %v982 = vsub.f32 1.0, %v981
    %v983 = vmul.f32 %v980, %v982
    %v984 = vadd.f32 %v980, %v983
    %vm985 = vweird.f32 %v979
    %vm986 = vweird.f32 %v980
    %vm987 = vmor %vm985, %vm986
    %v988 = vsel %vm987, %v980, %v984
    %v989 = vand.u32 2147483647, %v979
    %vm990 = vcmp.eq.f32.partialorder %v989, 8.507059e+37
    %v991 = vand.u32 %v979, 2147483648
    %v992 = vor.u32 1.1754944e-38, %v991
    %v993 = vsel %vm990, %v992, %v988
    %v994 = vmul.f32 1.0, %v993
    %v995 = vtanh.pop %v975
    %v996 = vmul.f32 %v994, %v845
    %998 = vrot.lane.b32.xlu0 %v995, 64
    %v999 = vpop.permute.xlu0 %998
    %v1001 = vmul.f32 %v994, %v999
    %1003 = vrot.lane.b32.xlu0 %v1001, 32
    %v1004 = vpop.permute.xlu0 %1003
    %v1006 = vadd.f32 %v996, %v1004
    %v1007 = vtanh.pop %v1006
    %1009 = vrot.lane.b32.xlu0 %v1007, 64
    %v1010 = vpop.permute.xlu0 %1009
    %v1012 = vmul.f32 %v994, %v1010
    %1013 = vrot.lane.b32.xlu0 %v948, 32
    %v1014 = vpop.permute.xlu0 %1013
    %v1017 = vrot.slane %v1012, 4
    %1018 = vrot.lane.b32.xlu0 %v1017, 64
    %v1019 = vpop.permute.xlu0 %1018
    %v1021 = vsel %vm218, %v1014, %v1019
    %v1023 = vrot.slane %v1021, 4
    %v1024 = vsel %vm220, %v1023, 0
    %1026 = vmatpush.msra.mxu0 0.0
    %1027 = vmatpush.msra.mxu0 0.0
    %1028 = vmatpush.msra.mxu0 0.0
    %1029 = vmatpush.msra.mxu0 0.0
    %1030 = vmatpush.msra.mxu0 0.0
    %1031 = vmatpush.msra.mxu0 0.0
    %1032 = vmatpush.msra.mxu0 0.0
    %1033 = vmatpush.msra.mxu0 0.0
    %1034 = vmatpush.msra.mxu0 %v165
    %1035 = vmatpush.msra.mxu0 %v163
    %1036 = vmatpush.msra.mxu0 %v161
    %1037 = vmatpush.msra.mxu0 %v159
    %1038 = vmatpush.msra.mxu0 %v157
    %1039 = vmatpush.msra.mxu0 %v155
    %1040 = vmatpush.msra.mxu0 %v153
    %1041 = vmatpush.msra.mxu0 %v151
    %1042 = vmatmul.f32.gmra.mxu0 %v1024
    %v1043 = vpop.f32.mrf.mxu0
    %v1044 = vadd.f32 0.0, %v1043
    %1045 = vdwg.mxu0
    %1046 = vmatpush.msra.mxu0 0.0
    %1047 = vmatpush.msra.mxu0 0.0
    %1048 = vmatpush.msra.mxu0 0.0
    %1049 = vmatpush.msra.mxu0 0.0
    %1050 = vmatpush.msra.mxu0 0.0
    %1051 = vmatpush.msra.mxu0 0.0
    %1052 = vmatpush.msra.mxu0 0.0
    %1053 = vmatpush.msra.mxu0 0.0
    %1054 = vmatpush.msra.mxu0 %v166
    %1055 = vmatpush.msra.mxu0 %v164
    %1056 = vmatpush.msra.mxu0 %v162
    %1057 = vmatpush.msra.mxu0 %v160
    %1058 = vmatpush.msra.mxu0 %v158
    %1059 = vmatpush.msra.mxu0 %v156
    %1060 = vmatpush.msra.mxu0 %v154
    %1061 = vmatpush.msra.mxu0 %v152
    %1062 = vmatmul.f32.gmra.mxu0 %v1024
    %v1063 = vpop.f32.mrf.mxu0
    %v1064 = vadd.f32 0.0, %v1063
    %1065 = vdwg.mxu0
    %v1067 = vrot.slane %v1044, 3
    %v1069 = vadd.f32 %v208, %v1067
    %v1070 = vxor.u32 %v1069, 2147483648
    %v1071 = vmul.f32 %v1070, 1.442695
    %v1072 = vpow.pop %v1071
    %v1073 = vadd.f32 %v1072, 1.0
    %v1074 = vrcp.pop %v1073
    %v1075 = vmul.f32 %v1073, %v1074
    %v1076 = vsub.f32 1.0, %v1075
    %v1077 = vmul.f32 %v1074, %v1076
    %v1078 = vadd.f32 %v1074, %v1077
    %vm1079 = vweird.f32 %v1073
    %vm1080 = vweird.f32 %v1074
    %vm1081 = vmor %vm1079, %vm1080
    %v1082 = vsel %vm1081, %v1074, %v1078
    %v1083 = vand.u32 2147483647, %v1073
    %vm1084 = vcmp.eq.f32.partialorder %v1083, 8.507059e+37
    %v1085 = vand.u32 %v1073, 2147483648
    %v1086 = vor.u32 1.1754944e-38, %v1085
    %v1087 = vsel %vm1084, %v1086, %v1082
    %v1088 = vmul.f32 1.0, %v1087
    %v1089 = vtanh.pop %v1069
    %v1091 = vrot.slane %v942, 7
    %v1093 = vmul.f32 %v1088, %v1091
    %1095 = vrot.lane.b32.xlu0 %v1089, 64
    %v1096 = vpop.permute.xlu0 %1095
    %v1098 = vmul.f32 %v1088, %v1096
    %1100 = vrot.lane.b32.xlu0 %v1098, 32
    %v1101 = vpop.permute.xlu0 %1100
    %v1103 = vadd.f32 %v1093, %v1101
    %v1104 = vtanh.pop %v1103
    %1106 = vrot.lane.b32.xlu0 %v1104, 64
    %v1107 = vpop.permute.xlu0 %1106
    %v1109 = vmul.f32 %v1088, %v1107
    %v1111 = vrot.slane %v1109, 5
    %1112 = vrot.lane.b32.xlu0 %v1111, 32
    %v1113 = vpop.permute.xlu0 %1112
    %v1114 = vsel %vm218, %v1113, 0
    %1116 = vmatpush.msra.mxu0 0.0
    %1117 = vmatpush.msra.mxu0 0.0
    %1118 = vmatpush.msra.mxu0 0.0
    %1119 = vmatpush.msra.mxu0 0.0
    %1120 = vmatpush.msra.mxu0 0.0
    %1121 = vmatpush.msra.mxu0 0.0
    %1122 = vmatpush.msra.mxu0 0.0
    %1123 = vmatpush.msra.mxu0 0.0
    %1124 = vmatpush.msra.mxu0 0.0
    %1125 = vmatpush.msra.mxu0 0.0
    %1126 = vmatpush.msra.mxu0 0.0
    %1127 = vmatpush.msra.mxu0 0.0
    %1128 = vmatpush.msra.mxu0 %v171
    %1129 = vmatpush.msra.mxu0 %v170
    %1130 = vmatpush.msra.mxu0 %v169
    %1131 = vmatpush.msra.mxu0 %v168
    %1132 = vmatmul.f32.gmra.mxu0 %v1114
    %v1133 = vpop.f32.mrf.mxu0
    %v1134 = vadd.f32 %v172, %v1133
    %1135 = vdwg.mxu0
    %v1136 = vadd.f32 %v1134, %v1064
    %v1137 = vxor.u32 %v1136, 2147483648
    %v1138 = vmul.f32 %v1137, 1.442695
    %v1139 = vpow.pop %v1138
    %v1140 = vadd.f32 %v1139, 1.0
    %v1141 = vrcp.pop %v1140
    %v1142 = vmul.f32 %v1140, %v1141
    %v1143 = vsub.f32 1.0, %v1142
    %v1144 = vmul.f32 %v1141, %v1143
    %v1145 = vadd.f32 %v1141, %v1144
    %vm1146 = vweird.f32 %v1140
    %vm1147 = vweird.f32 %v1141
    %vm1148 = vmor %vm1146, %vm1147
    %v1149 = vsel %vm1148, %v1141, %v1145
    %v1150 = vand.u32 2147483647, %v1140
    %vm1151 = vcmp.eq.f32.partialorder %v1150, 8.507059e+37
    %v1152 = vand.u32 %v1140, 2147483648
    %v1153 = vor.u32 1.1754944e-38, %v1152
    %v1154 = vsel %vm1151, %v1153, %v1149
    %v1155 = vmul.f32 1.0, %v1154
    %v1156 = vtanh.pop %v1136
    %v1157 = vmul.f32 %v1155, %v1006
    %1159 = vrot.lane.b32.xlu0 %v1156, 64
    %v1160 = vpop.permute.xlu0 %1159
    %v1162 = vmul.f32 %v1155, %v1160
    %1164 = vrot.lane.b32.xlu0 %v1162, 32
    %v1165 = vpop.permute.xlu0 %1164
    %v1167 = vadd.f32 %v1157, %v1165
    %v1168 = vtanh.pop %v1167
    %1170 = vrot.lane.b32.xlu0 %v1168, 64
    %v1171 = vpop.permute.xlu0 %1170
    %v1173 = vmul.f32 %v1155, %v1171
    %1174 = vrot.lane.b32.xlu0 %v1109, 32
    %v1175 = vpop.permute.xlu0 %1174
    %v1178 = vrot.slane %v1173, 3
    %1179 = vrot.lane.b32.xlu0 %v1178, 64
    %v1180 = vpop.permute.xlu0 %1179
    %v1182 = vsel %vm218, %v1175, %v1180
    %v1184 = vrot.slane %v1182, 5
    %v1185 = vsel %vm220, %v1184, 0
    %1187 = vmatpush.msra.mxu0 0.0
    %1188 = vmatpush.msra.mxu0 0.0
    %1189 = vmatpush.msra.mxu0 0.0
    %1190 = vmatpush.msra.mxu0 0.0
    %1191 = vmatpush.msra.mxu0 0.0
    %1192 = vmatpush.msra.mxu0 0.0
    %1193 = vmatpush.msra.mxu0 0.0
    %1194 = vmatpush.msra.mxu0 0.0
    %1195 = vmatpush.msra.mxu0 %v165
    %1196 = vmatpush.msra.mxu0 %v163
    %1197 = vmatpush.msra.mxu0 %v161
    %1198 = vmatpush.msra.mxu0 %v159
    %1199 = vmatpush.msra.mxu0 %v157
    %1200 = vmatpush.msra.mxu0 %v155
    %1201 = vmatpush.msra.mxu0 %v153
    %1202 = vmatpush.msra.mxu0 %v151
    %1203 = vmatmul.f32.gmra.mxu0 %v1185
    %v1204 = vpop.f32.mrf.mxu0
    %v1205 = vadd.f32 0.0, %v1204
    %1206 = vdwg.mxu0
    %1207 = vmatpush.msra.mxu0 0.0
    %1208 = vmatpush.msra.mxu0 0.0
    %1209 = vmatpush.msra.mxu0 0.0
    %1210 = vmatpush.msra.mxu0 0.0
    %1211 = vmatpush.msra.mxu0 0.0
    %1212 = vmatpush.msra.mxu0 0.0
    %1213 = vmatpush.msra.mxu0 0.0
    %1214 = vmatpush.msra.mxu0 0.0
    %1215 = vmatpush.msra.mxu0 %v166
    %1216 = vmatpush.msra.mxu0 %v164
    %1217 = vmatpush.msra.mxu0 %v162
    %1218 = vmatpush.msra.mxu0 %v160
    %1219 = vmatpush.msra.mxu0 %v158
    %1220 = vmatpush.msra.mxu0 %v156
    %1221 = vmatpush.msra.mxu0 %v154
    %1222 = vmatpush.msra.mxu0 %v152
    %1223 = vmatmul.f32.gmra.mxu0 %v1185
    %v1224 = vpop.f32.mrf.mxu0
    %v1225 = vadd.f32 0.0, %v1224
    %1226 = vdwg.mxu0
    %v1228 = vrot.slane %v1205, 2
    %v1230 = vadd.f32 %v208, %v1228
    %v1231 = vxor.u32 %v1230, 2147483648
    %v1232 = vmul.f32 %v1231, 1.442695
    %v1233 = vpow.pop %v1232
    %v1234 = vadd.f32 %v1233, 1.0
    %v1235 = vrcp.pop %v1234
    %v1236 = vmul.f32 %v1234, %v1235
    %v1237 = vsub.f32 1.0, %v1236
    %v1238 = vmul.f32 %v1235, %v1237
    %v1239 = vadd.f32 %v1235, %v1238
    %vm1240 = vweird.f32 %v1234
    %vm1241 = vweird.f32 %v1235
    %vm1242 = vmor %vm1240, %vm1241
    %v1243 = vsel %vm1242, %v1235, %v1239
    %v1244 = vand.u32 2147483647, %v1234
    %vm1245 = vcmp.eq.f32.partialorder %v1244, 8.507059e+37
    %v1246 = vand.u32 %v1234, 2147483648
    %v1247 = vor.u32 1.1754944e-38, %v1246
    %v1248 = vsel %vm1245, %v1247, %v1243
    %v1249 = vmul.f32 1.0, %v1248
    %v1250 = vtanh.pop %v1230
    %v1252 = vrot.slane %v1103, 7
    %v1254 = vmul.f32 %v1249, %v1252
    %1256 = vrot.lane.b32.xlu0 %v1250, 64
    %v1257 = vpop.permute.xlu0 %1256
    %v1259 = vmul.f32 %v1249, %v1257
    %1261 = vrot.lane.b32.xlu0 %v1259, 32
    %v1262 = vpop.permute.xlu0 %1261
    %v1264 = vadd.f32 %v1254, %v1262
    %v1265 = vtanh.pop %v1264
    %1267 = vrot.lane.b32.xlu0 %v1265, 64
    %v1268 = vpop.permute.xlu0 %1267
    %v1270 = vmul.f32 %v1249, %v1268
    %v1272 = vrot.slane %v1270, 6
    %1273 = vrot.lane.b32.xlu0 %v1272, 32
    %v1274 = vpop.permute.xlu0 %1273
    %v1275 = vsel %vm218, %v1274, 0
    %1277 = vmatpush.msra.mxu0 0.0
    %1278 = vmatpush.msra.mxu0 0.0
    %1279 = vmatpush.msra.mxu0 0.0
    %1280 = vmatpush.msra.mxu0 0.0
    %1281 = vmatpush.msra.mxu0 0.0
    %1282 = vmatpush.msra.mxu0 0.0
    %1283 = vmatpush.msra.mxu0 0.0
    %1284 = vmatpush.msra.mxu0 0.0
    %1285 = vmatpush.msra.mxu0 0.0
    %1286 = vmatpush.msra.mxu0 0.0
    %1287 = vmatpush.msra.mxu0 0.0
    %1288 = vmatpush.msra.mxu0 0.0
    %1289 = vmatpush.msra.mxu0 %v171
    %1290 = vmatpush.msra.mxu0 %v170
    %1291 = vmatpush.msra.mxu0 %v169
    %1292 = vmatpush.msra.mxu0 %v168
    %1293 = vmatmul.f32.gmra.mxu0 %v1275
    %v1294 = vpop.f32.mrf.mxu0
    %v1295 = vadd.f32 %v172, %v1294
    %1296 = vdwg.mxu0
    %v1297 = vadd.f32 %v1295, %v1225
    %v1298 = vxor.u32 %v1297, 2147483648
    %v1299 = vmul.f32 %v1298, 1.442695
    %v1300 = vpow.pop %v1299
    %v1301 = vadd.f32 %v1300, 1.0
    %v1302 = vrcp.pop %v1301
    %v1303 = vmul.f32 %v1301, %v1302
    %v1304 = vsub.f32 1.0, %v1303
    %v1305 = vmul.f32 %v1302, %v1304
    %v1306 = vadd.f32 %v1302, %v1305
    %vm1307 = vweird.f32 %v1301
    %vm1308 = vweird.f32 %v1302
    %vm1309 = vmor %vm1307, %vm1308
    %v1310 = vsel %vm1309, %v1302, %v1306
    %v1311 = vand.u32 2147483647, %v1301
    %vm1312 = vcmp.eq.f32.partialorder %v1311, 8.507059e+37
    %v1313 = vand.u32 %v1301, 2147483648
    %v1314 = vor.u32 1.1754944e-38, %v1313
    %v1315 = vsel %vm1312, %v1314, %v1310
    %v1316 = vmul.f32 1.0, %v1315
    %v1317 = vtanh.pop %v1297
    %v1318 = vmul.f32 %v1316, %v1167
    %1320 = vrot.lane.b32.xlu0 %v1317, 64
    %v1321 = vpop.permute.xlu0 %1320
    %v1323 = vmul.f32 %v1316, %v1321
    %1325 = vrot.lane.b32.xlu0 %v1323, 32
    %v1326 = vpop.permute.xlu0 %1325
    %v1328 = vadd.f32 %v1318, %v1326
    %v1329 = vtanh.pop %v1328
    %1331 = vrot.lane.b32.xlu0 %v1329, 64
    %v1332 = vpop.permute.xlu0 %1331
    %v1334 = vmul.f32 %v1316, %v1332
    %1335 = vrot.lane.b32.xlu0 %v1270, 32
    %v1336 = vpop.permute.xlu0 %1335
    %v1339 = vrot.slane %v1334, 2
    %1340 = vrot.lane.b32.xlu0 %v1339, 64
    %v1341 = vpop.permute.xlu0 %1340
    %v1343 = vsel %vm218, %v1336, %v1341
    %v1345 = vrot.slane %v1343, 6
    %v1346 = vsel %vm220, %v1345, 0
    %1348 = vmatpush.msra.mxu0 0.0
    %1349 = vmatpush.msra.mxu0 0.0
    %1350 = vmatpush.msra.mxu0 0.0
    %1351 = vmatpush.msra.mxu0 0.0
    %1352 = vmatpush.msra.mxu0 0.0
    %1353 = vmatpush.msra.mxu0 0.0
    %1354 = vmatpush.msra.mxu0 0.0
    %1355 = vmatpush.msra.mxu0 0.0
    %1356 = vmatpush.msra.mxu0 %v165
    %1357 = vmatpush.msra.mxu0 %v163
    %1358 = vmatpush.msra.mxu0 %v161
    %1359 = vmatpush.msra.mxu0 %v159
    %1360 = vmatpush.msra.mxu0 %v157
    %1361 = vmatpush.msra.mxu0 %v155
    %1362 = vmatpush.msra.mxu0 %v153
    %1363 = vmatpush.msra.mxu0 %v151
    %1364 = vmatmul.f32.gmra.mxu0 %v1346
    %v1365 = vpop.f32.mrf.mxu0
    %v1366 = vadd.f32 0.0, %v1365
    %1367 = vdwg.mxu0
    %1368 = vmatpush.msra.mxu0 0.0
    %1369 = vmatpush.msra.mxu0 0.0
    %1370 = vmatpush.msra.mxu0 0.0
    %1371 = vmatpush.msra.mxu0 0.0
    %1372 = vmatpush.msra.mxu0 0.0
    %1373 = vmatpush.msra.mxu0 0.0
    %1374 = vmatpush.msra.mxu0 0.0
    %1375 = vmatpush.msra.mxu0 0.0
    %1376 = vmatpush.msra.mxu0 %v166
    %1377 = vmatpush.msra.mxu0 %v164
    %1378 = vmatpush.msra.mxu0 %v162
    %1379 = vmatpush.msra.mxu0 %v160
    %1380 = vmatpush.msra.mxu0 %v158
    %1381 = vmatpush.msra.mxu0 %v156
    %1382 = vmatpush.msra.mxu0 %v154
    %1383 = vmatpush.msra.mxu0 %v152
    %1384 = vmatmul.f32.gmra.mxu0 %v1346
    %v1385 = vpop.f32.mrf.mxu0
    %v1386 = vadd.f32 0.0, %v1385
    %1387 = vdwg.mxu0
    %v1389 = vrot.slane %v1366, 1
    %v1391 = vadd.f32 %v208, %v1389
    %v1392 = vxor.u32 %v1391, 2147483648
    %v1393 = vmul.f32 %v1392, 1.442695
    %v1394 = vpow.pop %v1393
    %v1395 = vadd.f32 %v1394, 1.0
    %v1396 = vrcp.pop %v1395
    %v1397 = vmul.f32 %v1395, %v1396
    %v1398 = vsub.f32 1.0, %v1397
    %v1399 = vmul.f32 %v1396, %v1398
    %v1400 = vadd.f32 %v1396, %v1399
    %vm1401 = vweird.f32 %v1395
    %vm1402 = vweird.f32 %v1396
    %vm1403 = vmor %vm1401, %vm1402
    %v1404 = vsel %vm1403, %v1396, %v1400
    %v1405 = vand.u32 2147483647, %v1395
    %vm1406 = vcmp.eq.f32.partialorder %v1405, 8.507059e+37
    %v1407 = vand.u32 %v1395, 2147483648
    %v1408 = vor.u32 1.1754944e-38, %v1407
    %v1409 = vsel %vm1406, %v1408, %v1404
    %v1410 = vmul.f32 1.0, %v1409
    %v1411 = vtanh.pop %v1391
    %v1413 = vrot.slane %v1264, 7
    %v1415 = vmul.f32 %v1410, %v1413
    %1417 = vrot.lane.b32.xlu0 %v1411, 64
    %v1418 = vpop.permute.xlu0 %1417
    %v1420 = vmul.f32 %v1410, %v1418
    %1422 = vrot.lane.b32.xlu0 %v1420, 32
    %v1423 = vpop.permute.xlu0 %1422
    %v1425 = vadd.f32 %v1415, %v1423
    %v1426 = vtanh.pop %v1425
    %1428 = vrot.lane.b32.xlu0 %v1426, 64
    %v1429 = vpop.permute.xlu0 %1428
    %v1431 = vmul.f32 %v1410, %v1429
    %v1433 = vrot.slane %v1431, 7
    %1434 = vrot.lane.b32.xlu0 %v1433, 32
    %v1435 = vpop.permute.xlu0 %1434
    %v1436 = vsel %vm218, %v1435, 0
    %1438 = vmatpush.msra.mxu0 0.0
    %1439 = vmatpush.msra.mxu0 0.0
    %1440 = vmatpush.msra.mxu0 0.0
    %1441 = vmatpush.msra.mxu0 0.0
    %1442 = vmatpush.msra.mxu0 0.0
    %1443 = vmatpush.msra.mxu0 0.0
    %1444 = vmatpush.msra.mxu0 0.0
    %1445 = vmatpush.msra.mxu0 0.0
    %1446 = vmatpush.msra.mxu0 0.0
    %1447 = vmatpush.msra.mxu0 0.0
    %1448 = vmatpush.msra.mxu0 0.0
    %1449 = vmatpush.msra.mxu0 0.0
    %1450 = vmatpush.msra.mxu0 %v171
    %1451 = vmatpush.msra.mxu0 %v170
    %1452 = vmatpush.msra.mxu0 %v169
    %1453 = vmatpush.msra.mxu0 %v168
    %1454 = vmatmul.f32.gmra.mxu0 %v1436
    %v1455 = vpop.f32.mrf.mxu0
    %v1456 = vadd.f32 %v172, %v1455
    %1457 = vdwg.mxu0
    %v1458 = vadd.f32 %v1456, %v1386
    %v1459 = vxor.u32 %v1458, 2147483648
    %v1460 = vmul.f32 %v1459, 1.442695
    %v1461 = vpow.pop %v1460
    %v1462 = vadd.f32 %v1461, 1.0
    %v1463 = vrcp.pop %v1462
    %v1464 = vmul.f32 %v1462, %v1463
    %v1465 = vsub.f32 1.0, %v1464
    %v1466 = vmul.f32 %v1463, %v1465
    %v1467 = vadd.f32 %v1463, %v1466
    %vm1468 = vweird.f32 %v1462
    %vm1469 = vweird.f32 %v1463
    %vm1470 = vmor %vm1468, %vm1469
    %v1471 = vsel %vm1470, %v1463, %v1467
    %v1472 = vand.u32 2147483647, %v1462
    %vm1473 = vcmp.eq.f32.partialorder %v1472, 8.507059e+37
    %v1474 = vand.u32 %v1462, 2147483648
    %v1475 = vor.u32 1.1754944e-38, %v1474
    %v1476 = vsel %vm1473, %v1475, %v1471
    %v1477 = vmul.f32 1.0, %v1476
    %v1478 = vtanh.pop %v1458
    %v1479 = vmul.f32 %v1477, %v1328
    %1481 = vrot.lane.b32.xlu0 %v1478, 64
    %v1482 = vpop.permute.xlu0 %1481
    %v1484 = vmul.f32 %v1477, %v1482
    %1486 = vrot.lane.b32.xlu0 %v1484, 32
    %v1487 = vpop.permute.xlu0 %1486
    %v1489 = vadd.f32 %v1479, %v1487
    %v1490 = vtanh.pop %v1489
    %1492 = vrot.lane.b32.xlu0 %v1490, 64
    %v1493 = vpop.permute.xlu0 %1492
    %v1495 = vmul.f32 %v1477, %v1493
    %1497 = vrot.lane.b32.xlu0 %v1495, 32
    %v1498 = vpop.permute.xlu0 %1497
    %v1499 = vsel %vm218, %v1498, 0
    %1501 = vmatpush.msra.mxu0 0.0
    %1502 = vmatpush.msra.mxu0 0.0
    %1503 = vmatpush.msra.mxu0 0.0
    %1504 = vmatpush.msra.mxu0 0.0
    %1505 = vmatpush.msra.mxu0 0.0
    %1506 = vmatpush.msra.mxu0 0.0
    %1507 = vmatpush.msra.mxu0 0.0
    %1508 = vmatpush.msra.mxu0 0.0
    %1509 = vmatpush.msra.mxu0 0.0
    %1510 = vmatpush.msra.mxu0 0.0
    %1511 = vmatpush.msra.mxu0 0.0
    %1512 = vmatpush.msra.mxu0 0.0
    %1513 = vmatpush.msra.mxu0 %v176
    %1514 = vmatpush.msra.mxu0 %v175
    %1515 = vmatpush.msra.mxu0 %v174
    %1516 = vmatpush.msra.mxu0 %v173
    %1517 = vmatmul.f32.gmra.mxu0 %v1499
    %v1518 = vpop.f32.mrf.mxu0
    %v1519 = vadd.f32 %v177, %v1518
    %1520 = vdwg.mxu0
    %1521 = vst [vmem:[#allocation14] sm:$0x1] %v1519
    %1522 = vrot.lane.b32.xlu0 %v1431, 32
    %v1523 = vpop.permute.xlu0 %1522
    %vm1525 = vcmask 261127
    %1526 = vst.msk [vmem:[#allocation15 - $0x7] sm:$0x80] %vm1525, %v1523
    %vm1528 = vcmask 253952
    %1529 = vst.msk [vmem:[#allocation15 + $0x1] sm:$0x1] %vm1528, %v1498
    %1531 = vrot.lane.b32.xlu0 %v1425, 96
    %v1532 = vpop.permute.xlu0 %1531
    %1534 = vst.msk [vmem:[#allocation17 - $0x7] sm:$0x80] %vm1525, %v1532
    %1536 = vrot.lane.b32.xlu0 %v1489, 96
    %v1537 = vpop.permute.xlu0 %1536
    %1539 = vst.msk [vmem:[#allocation17 + $0x1] sm:$0x1] %vm1528, %v1537
    // Predicated region
    $region70: #{tpu_custom_call.1} parent=1 // pred_check
      _
    $region71: #{tpu_custom_call.1} parent=1 // pred_check_branch
      %1541 = sbr.rel (0) target = $region73
    $region72: #{tpu_custom_call.1} parent=1 // pred_region
      %1543 = vsyncadd [#allocation4], 0
      %s1545 = sshll.u32 [#allocation14], 4
      %s1546 = int_to_ptr.vmem [resolvable:$true] %s1545
      %s1547 = sshll.u32 %s10, 4
      %s1548 = int_to_ptr.hbm [resolvable:$true] %s1547
      %1550 = dma.vmem_to_hbm [thread:$0]  %s1546, 16, %s1548, [#allocation4]
    $region73: #{tpu_custom_call.1} parent=1 // pred_fallthru
      _
    // Predicated region
    $region74: #{tpu_custom_call.1} parent=1 // pred_check
      _
    $region75: #{tpu_custom_call.1} parent=1 // pred_check_branch
      %1552 = sbr.rel (0) target = $region77
    $region76: #{tpu_custom_call.1} parent=1 // pred_region
      %1554 = vsyncadd [#allocation16], 0
      %s1556 = sshll.u32 [#allocation15], 4
      %s1557 = int_to_ptr.vmem [resolvable:$true] %s1556
      %s1558 = sshll.u32 %s11, 4
      %s1559 = int_to_ptr.hbm [resolvable:$true] %s1558
      %1561 = dma.vmem_to_hbm [thread:$0]  %s1557, 32, %s1559, [#allocation16]
    $region77: #{tpu_custom_call.1} parent=1 // pred_fallthru
      _
    // Predicated region
    $region78: #{tpu_custom_call.1} parent=1 // pred_check
      _
    $region79: #{tpu_custom_call.1} parent=1 // pred_check_branch
      %1563 = sbr.rel (0) target = $region81
    $region80: #{tpu_custom_call.1} parent=1 // pred_region
      %1565 = vsyncadd [#allocation16], 0
      %s1567 = sshll.u32 [#allocation17], 4
      %s1568 = int_to_ptr.vmem [resolvable:$true] %s1567
      %s1569 = sshll.u32 %s12, 4
      %s1570 = int_to_ptr.hbm [resolvable:$true] %s1569
      %1572 = dma.vmem_to_hbm [thread:$0]  %s1568, 32, %s1570, [#allocation16]
    $region81: #{tpu_custom_call.1} parent=1 // pred_fallthru
      _
    // Predicated region
    $region82: #{tpu_custom_call.1} parent=1 // pred_check
      _
    $region83: #{tpu_custom_call.1} parent=1 // pred_check_branch
      %1574 = sbr.rel (0) target = $region85
    $region84: #{tpu_custom_call.1} parent=1 // pred_region
      %1576 = dma.done [#allocation4], 16
    $region85: #{tpu_custom_call.1} parent=1 // pred_fallthru
      _
    // Predicated region
    $region86: #{tpu_custom_call.1} parent=1 // pred_check
      _
    $region87: #{tpu_custom_call.1} parent=1 // pred_check_branch
      %1578 = sbr.rel (0) target = $region89
    $region88: #{tpu_custom_call.1} parent=1 // pred_region
      %1580 = dma.done [#allocation16], 32
    $region89: #{tpu_custom_call.1} parent=1 // pred_fallthru
      _
    // Predicated region
    $region90: #{tpu_custom_call.1} parent=1 // pred_check
      _
    $region91: #{tpu_custom_call.1} parent=1 // pred_check_branch
      %1582 = sbr.rel (0) target = $region93
    $region92: #{tpu_custom_call.1} parent=1 // pred_region
      %1584 = dma.done [#allocation16], 32
    $region93: #{tpu_custom_call.1} parent=1 // pred_fallthru
      _
    %1585 = vsyncpa [#allocation3], 1
    %1586 = vsyncpa [#allocation6], 1
    %1587 = vsyncpa [#allocation9], 1
    %1588 = vsyncpa [#allocation12], 1
    %1589 = vsyncpa [#allocation4], 1
    %1590 = vsyncpa [#allocation16], 1

</llo_original>
